<compile_context>
chip_gen: v5e
topology: v5e:2x2
jax: 0.10.0
libtpu: 0.0.40
codegen_flags: <defaults>
</compile_context>

<pallas_src>
import jax
import jax.numpy as jnp
from jax.experimental import pallas as pl
from jax.experimental.pallas import tpu as pltpu

IN_F = 28 * 28      # 784
H1 = 512
H2 = 256
OUT_F = 10
OUT_PAD = 128       # lane-dense output slab (real logits live in [:, :10])


def _mlp_kernel(x_ref, w1_ref, b1_ref, w2_ref, b2_ref, w3_ref, b3_ref, o_ref):
    # Layer 1: cast f32 activations -> bf16 on the VPU (cheap, hidden under the MXU),
    # (Tb, 784)bf16 @ (784, 512)bf16 with f32 accumulation, + bias, ReLU.
    x = x_ref[...].astype(jnp.bfloat16)
    h1 = jnp.dot(x, w1_ref[...], preferred_element_type=jnp.float32)
    h1 = jnp.maximum(h1 + b1_ref[...], 0.0).astype(jnp.bfloat16)
    # Layer 2: (Tb, 512) @ (512, 256)
    h2 = jnp.dot(h1, w2_ref[...], preferred_element_type=jnp.float32)
    h2 = jnp.maximum(h2 + b2_ref[...], 0.0).astype(jnp.bfloat16)
    # Layer 3: (Tb, 256) @ (256, 128) -- padded logits; bias added on the f32 accumulator,
    # then stored as a lane-dense bf16 slab.
    logits = jnp.dot(h2, w3_ref[...], preferred_element_type=jnp.float32) + b3_ref[...]
    o_ref[...] = logits.astype(o_ref.dtype)


def _pick_tiling(batch):
    """Pick (tile_b, padded_batch).

    tile_b is a multiple of 16 (bf16 sublane packing), at most 512 rows, and the grid
    has >= 2 steps whenever the batch allows so the v7x megacore can split the batch axis.
    Padding waste is kept minimal by splitting the batch evenly across the grid steps.
    """
    b16 = -(-batch // 16) * 16                      # round up to a multiple of 16
    if b16 <= 16:
        return 16, 16
    n_steps = max(2, -(-b16 // 512))                # >= 2 steps, tiles <= 512 rows
    tile_b = -(-(-(-b16 // n_steps)) // 16) * 16    # ceil(b16/n_steps) rounded up to 16
    return tile_b, n_steps * tile_b


@jax.jit
def mlp_forward(x_nchw, params):
    w1, b1, w2, b2, w3, b3 = params
    B = x_nchw.shape[0]
    tile_b, b_pad = _pick_tiling(B)

    # x.view(-1, 784); only pad the batch dim -- activations stay f32, cast happens in-kernel.
    x = x_nchw.reshape(B, IN_F).astype(jnp.float32)
    x = jnp.pad(x, ((0, b_pad - B), (0, 0)))

    # Weights stored (in_features, out_features); bf16 into the MXU.
    w1b = w1.astype(jnp.bfloat16)
    w2b = w2.astype(jnp.bfloat16)
    w3p = jnp.pad(w3, ((0, 0), (0, OUT_PAD - OUT_F))).astype(jnp.bfloat16)

    # Biases stay f32 (added on the f32 accumulator), presented as (1, N) tiles.
    b1r = b1.reshape(1, H1).astype(jnp.float32)
    b2r = b2.reshape(1, H2).astype(jnp.float32)
    b3p = jnp.pad(b3.reshape(1, OUT_F), ((0, 0), (0, OUT_PAD - OUT_F))).astype(jnp.float32)

    grid = (b_pad // tile_b,)
    resident = lambda shape: pl.BlockSpec(shape, lambda i: (0, 0))  # weights stay put

    flops = 2 * b_pad * (IN_F * H1 + H1 * H2 + H2 * OUT_PAD)
    bytes_accessed = (
        x.size * 4                                   # f32 activations, read once
        + w1b.size * 2 + w2b.size * 2 + w3p.size * 2  # bf16 weights
        + b1r.size * 4 + b2r.size * 4 + b3p.size * 4
        + b_pad * OUT_PAD * 2                        # bf16 output slab
    )

    out = pl.pallas_call(
        _mlp_kernel,
        out_shape=jax.ShapeDtypeStruct((b_pad, OUT_PAD), jnp.bfloat16),
        grid=grid,
        in_specs=[
            pl.BlockSpec((tile_b, IN_F), lambda i: (i, 0)),   # x: tiled on batch, f32
            resident((IN_F, H1)),
            resident((1, H1)),
            resident((H1, H2)),
            resident((1, H2)),
            resident((H2, OUT_PAD)),
            resident((1, OUT_PAD)),
        ],
        out_specs=pl.BlockSpec((tile_b, OUT_PAD), lambda i: (i, 0)),
        compiler_params=pltpu.CompilerParams(
            dimension_semantics=("parallel",),   # megacore splits the batch axis on v7x
            vmem_limit_bytes=32 << 20,
        ),
        cost_estimate=pl.CostEstimate(
            flops=flops, transcendentals=0, bytes_accessed=bytes_accessed),
    )(x, w1b, b1r, w2b, b2r, w3p, b3p)

    return out[:B, :OUT_F].astype(jnp.float32)


def init_params(key):
    """Deterministic parameter init matching nn.Linear shapes (weights pre-transposed)."""
    k1, k2, k3, k4, k5, k6 = jax.random.split(key, 6)

    def uniform(k, shape, fan_in):
        bound = 1.0 / jnp.sqrt(fan_in)
        return jax.random.uniform(k, shape, jnp.float32, -bound, bound)

    w1 = uniform(k1, (IN_F, H1), float(IN_F))
    b1 = uniform(k2, (H1,), float(IN_F))
    w2 = uniform(k3, (H1, H2), float(H1))
    b2 = uniform(k4, (H2,), float(H1))
    w3 = uniform(k5, (H2, OUT_F), float(H2))
    b3 = uniform(k6, (OUT_F,), float(H2))
    return (w1, b1, w2, b2, w3, b3)


def reference_forward_bf16(x_nchw, params):
    """Pure-JAX reference with the same bf16-in / f32-accumulate numerics as the kernel."""
    w1, b1, w2, b2, w3, b3 = params
    x = x_nchw.reshape(x_nchw.shape[0], -1).astype(jnp.bfloat16)
    h1 = jnp.dot(x, w1.astype(jnp.bfloat16), preferred_element_type=jnp.float32) + b1
    h1 = jnp.maximum(h1, 0.0).astype(jnp.bfloat16)
    h2 = jnp.dot(h1, w2.astype(jnp.bfloat16), preferred_element_type=jnp.float32) + b2
    h2 = jnp.maximum(h2, 0.0).astype(jnp.bfloat16)
    logits = jnp.dot(h2, w3.astype(jnp.bfloat16), preferred_element_type=jnp.float32) + b3
    # Kernel stores bf16 logits; round the reference the same way before comparing.
    return logits.astype(jnp.bfloat16).astype(jnp.float32)


if __name__ == "__main__":
    key = jax.random.PRNGKey(0)
    kx, kp = jax.random.split(key)

    # Small MNIST-like batch: (B, C, H, W) = (8, 1, 28, 28)
    x = jax.random.normal(kx, (8, 1, 28, 28), jnp.float32)
    params = init_params(kp)

    out = mlp_forward(x, params)
    out = jax.block_until_ready(out)

    ref = reference_forward_bf16(x, params)
    assert out.shape == (8, OUT_F), out.shape
    assert jnp.allclose(out, ref, atol=1e-2, rtol=1e-2), "Pallas output mismatch vs reference"

    print("KERNEL_OK")
</pallas_src>

<mosaic_0001>
module attributes {stable_mosaic.version = 11 : i64} {
  func.func @_mlp_kernel(%arg0: i32, %arg1: memref<16x784xf32, #tpu.memory_space<vmem>>, %arg2: memref<784x512xbf16, #tpu.memory_space<vmem>>, %arg3: memref<1x512xf32, #tpu.memory_space<vmem>>, %arg4: memref<512x256xbf16, #tpu.memory_space<vmem>>, %arg5: memref<1x256xf32, #tpu.memory_space<vmem>>, %arg6: memref<256x128xbf16, #tpu.memory_space<vmem>>, %arg7: memref<1x128xf32, #tpu.memory_space<vmem>>, %arg8: memref<16x128xbf16, #tpu.memory_space<vmem>>) attributes {dimension_semantics = [#tpu.dimension_semantics<parallel>], iteration_bounds = array<i64: 1>, scalar_prefetch = 0 : i64, scratch_operands = 0 : i64, tpu.core_type = #tpu.core_type<tc>, window_params = [{transform_indices = @transform_0, window_bounds = array<i64: 16, 784>}, {pipeline_mode = #tpu.pipeline_mode<synchronous>, transform_indices = @transform_1, window_bounds = array<i64: 784, 512>}, {pipeline_mode = #tpu.pipeline_mode<synchronous>, transform_indices = @transform_2, window_bounds = array<i64: 1, 512>}, {pipeline_mode = #tpu.pipeline_mode<synchronous>, transform_indices = @transform_3, window_bounds = array<i64: 512, 256>}, {pipeline_mode = #tpu.pipeline_mode<synchronous>, transform_indices = @transform_4, window_bounds = array<i64: 1, 256>}, {pipeline_mode = #tpu.pipeline_mode<synchronous>, transform_indices = @transform_5, window_bounds = array<i64: 256, 128>}, {pipeline_mode = #tpu.pipeline_mode<synchronous>, transform_indices = @transform_6, window_bounds = array<i64: 1, 128>}, {transform_indices = @transform_7, window_bounds = array<i64: 16, 128>}]} {
    %c0 = arith.constant 0 : index
    %c0_0 = arith.constant 0 : index
    %0 = vector.load %arg1[%c0, %c0_0] : memref<16x784xf32, #tpu.memory_space<vmem>>, vector<16x784xf32>
    %1 = arith.truncf %0 : vector<16x784xf32> to vector<16x784xbf16>
    %c0_1 = arith.constant 0 : index
    %c0_2 = arith.constant 0 : index
    %2 = vector.load %arg2[%c0_1, %c0_2] : memref<784x512xbf16, #tpu.memory_space<vmem>>, vector<784x512xbf16>
    %cst = arith.constant dense<0.000000e+00> : vector<16x512xf32>
    %3 = tpu.matmul %1, %2, %cst {dimension_numbers = #tpu.dot_dimension_numbers<[1], [0], [0], [1], [0, 0, 1, 1], [], []>} : vector<16x784xbf16>, vector<784x512xbf16>, vector<16x512xf32> -> vector<16x512xf32>
    %c0_3 = arith.constant 0 : index
    %c0_4 = arith.constant 0 : index
    %4 = vector.load %arg3[%c0_3, %c0_4] : memref<1x512xf32, #tpu.memory_space<vmem>>, vector<1x512xf32>
    %5 = vector.broadcast %4 : vector<1x512xf32> to vector<16x512xf32>
    %6 = arith.addf %3, %5 : vector<16x512xf32>
    %cst_5 = arith.constant 0.000000e+00 : f32
    %7 = vector.broadcast %cst_5 : f32 to vector<16x512xf32>
    %8 = arith.maximumf %6, %7 : vector<16x512xf32>
    %9 = arith.truncf %8 : vector<16x512xf32> to vector<16x512xbf16>
    %c0_6 = arith.constant 0 : index
    %c0_7 = arith.constant 0 : index
    %10 = vector.load %arg4[%c0_6, %c0_7] : memref<512x256xbf16, #tpu.memory_space<vmem>>, vector<512x256xbf16>
    %cst_8 = arith.constant dense<0.000000e+00> : vector<16x256xf32>
    %11 = tpu.matmul %9, %10, %cst_8 {dimension_numbers = #tpu.dot_dimension_numbers<[1], [0], [0], [1], [0, 0, 1, 1], [], []>} : vector<16x512xbf16>, vector<512x256xbf16>, vector<16x256xf32> -> vector<16x256xf32>
    %c0_9 = arith.constant 0 : index
    %c0_10 = arith.constant 0 : index
    %12 = vector.load %arg5[%c0_9, %c0_10] : memref<1x256xf32, #tpu.memory_space<vmem>>, vector<1x256xf32>
    %13 = vector.broadcast %12 : vector<1x256xf32> to vector<16x256xf32>
    %14 = arith.addf %11, %13 : vector<16x256xf32>
    %cst_11 = arith.constant 0.000000e+00 : f32
    %15 = vector.broadcast %cst_11 : f32 to vector<16x256xf32>
    %16 = arith.maximumf %14, %15 : vector<16x256xf32>
    %17 = arith.truncf %16 : vector<16x256xf32> to vector<16x256xbf16>
    %c0_12 = arith.constant 0 : index
    %c0_13 = arith.constant 0 : index
    %18 = vector.load %arg6[%c0_12, %c0_13] : memref<256x128xbf16, #tpu.memory_space<vmem>>, vector<256x128xbf16>
    %cst_14 = arith.constant dense<0.000000e+00> : vector<16x128xf32>
    %19 = tpu.matmul %17, %18, %cst_14 {dimension_numbers = #tpu.dot_dimension_numbers<[1], [0], [0], [1], [0, 0, 1, 1], [], []>} : vector<16x256xbf16>, vector<256x128xbf16>, vector<16x128xf32> -> vector<16x128xf32>
    %c0_15 = arith.constant 0 : index
    %c0_16 = arith.constant 0 : index
    %20 = vector.load %arg7[%c0_15, %c0_16] : memref<1x128xf32, #tpu.memory_space<vmem>>, vector<1x128xf32>
    %21 = vector.broadcast %20 : vector<1x128xf32> to vector<16x128xf32>
    %22 = arith.addf %19, %21 : vector<16x128xf32>
    %23 = arith.truncf %22 : vector<16x128xf32> to vector<16x128xbf16>
    %c0_17 = arith.constant 0 : index
    %c0_18 = arith.constant 0 : index
    %24 = vector.load %arg8[%c0_17, %c0_18] : memref<16x128xbf16, #tpu.memory_space<vmem>>, vector<16x128xbf16>
    tpu.vector_store %arg8[%c0_17, %c0_18], %23 {strides = array<i32>} : memref<16x128xbf16, #tpu.memory_space<vmem>>, vector<16x128xbf16>,
    return
  }
  func.func @transform_0(%arg0: i32) -> (i32, i32) {
    %c0_i32 = arith.constant 0 : i32
    %c0_i32_0 = arith.constant 0 : i32
    return %arg0, %c0_i32 : i32, i32
  }
  func.func @transform_1(%arg0: i32) -> (i32, i32) {
    %c0_i32 = arith.constant 0 : i32
    %c0_i32_0 = arith.constant 0 : i32
    %c0_i32_1 = arith.constant 0 : i32
    return %c0_i32, %c0_i32_0 : i32, i32
  }
  func.func @transform_2(%arg0: i32) -> (i32, i32) {
    %c0_i32 = arith.constant 0 : i32
    %c0_i32_0 = arith.constant 0 : i32
    %c0_i32_1 = arith.constant 0 : i32
    return %c0_i32, %c0_i32_0 : i32, i32
  }
  func.func @transform_3(%arg0: i32) -> (i32, i32) {
    %c0_i32 = arith.constant 0 : i32
    %c0_i32_0 = arith.constant 0 : i32
    %c0_i32_1 = arith.constant 0 : i32
    return %c0_i32, %c0_i32_0 : i32, i32
  }
  func.func @transform_4(%arg0: i32) -> (i32, i32) {
    %c0_i32 = arith.constant 0 : i32
    %c0_i32_0 = arith.constant 0 : i32
    %c0_i32_1 = arith.constant 0 : i32
    return %c0_i32, %c0_i32_0 : i32, i32
  }
  func.func @transform_5(%arg0: i32) -> (i32, i32) {
    %c0_i32 = arith.constant 0 : i32
    %c0_i32_0 = arith.constant 0 : i32
    %c0_i32_1 = arith.constant 0 : i32
    return %c0_i32, %c0_i32_0 : i32, i32
  }
  func.func @transform_6(%arg0: i32) -> (i32, i32) {
    %c0_i32 = arith.constant 0 : i32
    %c0_i32_0 = arith.constant 0 : i32
    %c0_i32_1 = arith.constant 0 : i32
    return %c0_i32, %c0_i32_0 : i32, i32
  }
  func.func @transform_7(%arg0: i32) -> (i32, i32) {
    %c0_i32 = arith.constant 0 : i32
    %c0_i32_0 = arith.constant 0 : i32
    return %arg0, %c0_i32 : i32, i32
  }
}

</mosaic_0001>

<llo_original>
// kernel: mlp_forward.1
$region0: #{mlp_forward.1}
  #allocation0 [shape = 'u32[]', space=smem, size = 0x4, offset = 0x4, fixed_abs, tag = 'smem constant byte address 0x4 - core index']
  #allocation1 [shape = 'u32[72,128]{1,0:T(1,128)}', space=vmem, size = 0x9000, scoped, tag = 'internal scratch']
  %s0 = inlined_call_operand.vmem [shape: f32[16,784], index: 0, kind: input, shape index: {}]
  %s1 = inlined_call_operand.vmem [shape: bf16[784,512], index: 1, kind: input, shape index: {}]
  %s2 = inlined_call_operand.vmem [shape: f32[1,512], index: 2, kind: input, shape index: {}]
  %s3 = inlined_call_operand.vmem [shape: bf16[512,256], index: 3, kind: input, shape index: {}]
  %s4 = inlined_call_operand.vmem [shape: f32[1,256], index: 4, kind: input, shape index: {}]
  %s5 = inlined_call_operand.vmem [shape: bf16[256,128], index: 5, kind: input, shape index: {}]
  %s6 = inlined_call_operand.vmem [shape: f32[1,128], index: 6, kind: input, shape index: {}]
  %s7 = inlined_call_operand.vmem [shape: bf16[16,128], index: 7, kind: output, shape index: {}]
  %s8 = sld [smem:[#allocation0]]
  $region38: #{mlp_forward.1} parent=0
    _
  %s10 = ssub.s32 1, %s8
  %s11 = scalar_select 0, %s10, %s8
  // Predicated region
  $region2: #{mlp_forward.1} parent=0 // pred_check
    _
  $region3: #{mlp_forward.1} parent=0 // pred_check_branch
    %13 = sbr.rel (0) target = $region5
  $region4: #{mlp_forward.1} parent=0 // pred_region
    _
  $region5: #{mlp_forward.1} parent=0 // pred_fallthru
    _
  // Predicated region
  $region6: #{mlp_forward.1} parent=0 // pred_check
    _
  $region7: #{mlp_forward.1} parent=0 // pred_check_branch
    %15 = sbr.rel (0) target = $region9
  $region8: #{mlp_forward.1} parent=0 // pred_region
    _
  $region9: #{mlp_forward.1} parent=0 // pred_fallthru
    _
  // Predicated region
  $region10: #{mlp_forward.1} parent=0 // pred_check
    _
  $region11: #{mlp_forward.1} parent=0 // pred_check_branch
    %17 = sbr.rel (0) target = $region13
  $region12: #{mlp_forward.1} parent=0 // pred_region
    _
  $region13: #{mlp_forward.1} parent=0 // pred_fallthru
    _
  // Predicated region
  $region14: #{mlp_forward.1} parent=0 // pred_check
    _
  $region15: #{mlp_forward.1} parent=0 // pred_check_branch
    %19 = sbr.rel (0) target = $region17
  $region16: #{mlp_forward.1} parent=0 // pred_region
    _
  $region17: #{mlp_forward.1} parent=0 // pred_fallthru
    _
  // Predicated region
  $region18: #{mlp_forward.1} parent=0 // pred_check
    _
  $region19: #{mlp_forward.1} parent=0 // pred_check_branch
    %21 = sbr.rel (0) target = $region21
  $region20: #{mlp_forward.1} parent=0 // pred_region
    _
  $region21: #{mlp_forward.1} parent=0 // pred_fallthru
    _
  // Predicated region
  $region22: #{mlp_forward.1} parent=0 // pred_check
    _
  $region23: #{mlp_forward.1} parent=0 // pred_check_branch
    %23 = sbr.rel (0) target = $region25
  $region24: #{mlp_forward.1} parent=0 // pred_region
    _
  $region25: #{mlp_forward.1} parent=0 // pred_fallthru
    _
  // Predicated region
  $region26: #{mlp_forward.1} parent=0 // pred_check
    _
  $region27: #{mlp_forward.1} parent=0 // pred_check_branch
    %25 = sbr.rel (0) target = $region29
  $region28: #{mlp_forward.1} parent=0 // pred_region
    _
  $region29: #{mlp_forward.1} parent=0 // pred_fallthru
    _
  %v27 = vld [vmem:[%s0] sm:$0xff]
  %v28 = vld [vmem:[%s0 + $0x8] sm:$0xff]
  %v29 = vld [vmem:[%s0 + $0x10] sm:$0xff]
  %v30 = vld [vmem:[%s0 + $0x18] sm:$0xff]
  %v31 = vld [vmem:[%s0 + $0x20] sm:$0xff]
  %v32 = vld [vmem:[%s0 + $0x28] sm:$0xff]
  %v33 = vld [vmem:[%s0 + $0x30] sm:$0xff]
  %v34 = vld [vmem:[%s0 + $0x38] sm:$0xff]
  %v35 = vld [vmem:[%s0 + $0x40] sm:$0xff]
  %v36 = vld [vmem:[%s0 + $0x48] sm:$0xff]
  %v37 = vld [vmem:[%s0 + $0x50] sm:$0xff]
  %v38 = vld [vmem:[%s0 + $0x58] sm:$0xff]
  %v39 = vld [vmem:[%s0 + $0x60] sm:$0xff]
  %v40 = vld [vmem:[%s0 + $0x68] sm:$0xff]
  %v41 = vpack.c.bf16 %v34, %v27
  %v42 = vpack.c.bf16 %v35, %v28
  %v43 = vpack.c.bf16 %v36, %v29
  %v44 = vpack.c.bf16 %v37, %v30
  %v45 = vpack.c.bf16 %v38, %v31
  %v46 = vpack.c.bf16 %v39, %v32
  %v47 = vpack.c.bf16 %v40, %v33
  %v48 = vld [vmem:[%s1] sm:$0xff]
  %v49 = vld [vmem:[%s1 + $0x8] sm:$0xff]
  %v50 = vld [vmem:[%s1 + $0x10] sm:$0xff]
  %v51 = vld [vmem:[%s1 + $0x18] sm:$0xff]
  %v52 = vld [vmem:[%s1 + $0x20] sm:$0xff]
  %v53 = vld [vmem:[%s1 + $0x28] sm:$0xff]
  %v54 = vld [vmem:[%s1 + $0x30] sm:$0xff]
  %v55 = vld [vmem:[%s1 + $0x38] sm:$0xff]
  %v56 = vld [vmem:[%s1 + $0x40] sm:$0xff]
  %v57 = vld [vmem:[%s1 + $0x48] sm:$0xff]
  %v58 = vld [vmem:[%s1 + $0x50] sm:$0xff]
  %v59 = vld [vmem:[%s1 + $0x58] sm:$0xff]
  %v60 = vld [vmem:[%s1 + $0x60] sm:$0xff]
  %v61 = vld [vmem:[%s1 + $0x68] sm:$0xff]
  %v62 = vld [vmem:[%s1 + $0x70] sm:$0xff]
  %v63 = vld [vmem:[%s1 + $0x78] sm:$0xff]
  %v64 = vld [vmem:[%s1 + $0x80] sm:$0xff]
  %v65 = vld [vmem:[%s1 + $0x88] sm:$0xff]
  %v66 = vld [vmem:[%s1 + $0x90] sm:$0xff]
  %v67 = vld [vmem:[%s1 + $0x98] sm:$0xff]
  %v68 = vld [vmem:[%s1 + $0xa0] sm:$0xff]
  %v69 = vld [vmem:[%s1 + $0xa8] sm:$0xff]
  %v70 = vld [vmem:[%s1 + $0xb0] sm:$0xff]
  %v71 = vld [vmem:[%s1 + $0xb8] sm:$0xff]
  %v72 = vld [vmem:[%s1 + $0xc0] sm:$0xff]
  %v73 = vld [vmem:[%s1 + $0xc8] sm:$0xff]
  %v74 = vld [vmem:[%s1 + $0xd0] sm:$0xff]
  %v75 = vld [vmem:[%s1 + $0xd8] sm:$0xff]
  %v76 = vld [vmem:[%s1 + $0xe0] sm:$0xff]
  %v77 = vld [vmem:[%s1 + $0xe8] sm:$0xff]
  %v78 = vld [vmem:[%s1 + $0xf0] sm:$0xff]
  %v79 = vld [vmem:[%s1 + $0xf8] sm:$0xff]
  %v80 = vld [vmem:[%s1 + $0x100] sm:$0xff]
  %v81 = vld [vmem:[%s1 + $0x108] sm:$0xff]
  %v82 = vld [vmem:[%s1 + $0x110] sm:$0xff]
  %v83 = vld [vmem:[%s1 + $0x118] sm:$0xff]
  %v84 = vld [vmem:[%s1 + $0x120] sm:$0xff]
  %v85 = vld [vmem:[%s1 + $0x128] sm:$0xff]
  %v86 = vld [vmem:[%s1 + $0x130] sm:$0xff]
  %v87 = vld [vmem:[%s1 + $0x138] sm:$0xff]
  %v88 = vld [vmem:[%s1 + $0x140] sm:$0xff]
  %v89 = vld [vmem:[%s1 + $0x148] sm:$0xff]
  %v90 = vld [vmem:[%s1 + $0x150] sm:$0xff]
  %v91 = vld [vmem:[%s1 + $0x158] sm:$0xff]
  %v92 = vld [vmem:[%s1 + $0x160] sm:$0xff]
  %v93 = vld [vmem:[%s1 + $0x168] sm:$0xff]
  %v94 = vld [vmem:[%s1 + $0x170] sm:$0xff]
  %v95 = vld [vmem:[%s1 + $0x178] sm:$0xff]
  %v96 = vld [vmem:[%s1 + $0x180] sm:$0xff]
  %v97 = vld [vmem:[%s1 + $0x188] sm:$0xff]
  %v98 = vld [vmem:[%s1 + $0x190] sm:$0xff]
  %v99 = vld [vmem:[%s1 + $0x198] sm:$0xff]
  %v100 = vld [vmem:[%s1 + $0x1a0] sm:$0xff]
  %v101 = vld [vmem:[%s1 + $0x1a8] sm:$0xff]
  %v102 = vld [vmem:[%s1 + $0x1b0] sm:$0xff]
  %v103 = vld [vmem:[%s1 + $0x1b8] sm:$0xff]
  %v104 = vld [vmem:[%s1 + $0x1c0] sm:$0xff]
  %v105 = vld [vmem:[%s1 + $0x1c8] sm:$0xff]
  %v106 = vld [vmem:[%s1 + $0x1d0] sm:$0xff]
  %v107 = vld [vmem:[%s1 + $0x1d8] sm:$0xff]
  %v108 = vld [vmem:[%s1 + $0x1e0] sm:$0xff]
  %v109 = vld [vmem:[%s1 + $0x1e8] sm:$0xff]
  %v110 = vld [vmem:[%s1 + $0x1f0] sm:$0xff]
  %v111 = vld [vmem:[%s1 + $0x1f8] sm:$0xff]
  %v112 = vld [vmem:[%s1 + $0x200] sm:$0xff]
  %v113 = vld [vmem:[%s1 + $0x208] sm:$0xff]
  %v114 = vld [vmem:[%s1 + $0x210] sm:$0xff]
  %v115 = vld [vmem:[%s1 + $0x218] sm:$0xff]
  %v116 = vld [vmem:[%s1 + $0x220] sm:$0xff]
  %v117 = vld [vmem:[%s1 + $0x228] sm:$0xff]
  %v118 = vld [vmem:[%s1 + $0x230] sm:$0xff]
  %v119 = vld [vmem:[%s1 + $0x238] sm:$0xff]
  %v120 = vld [vmem:[%s1 + $0x240] sm:$0xff]
  %v121 = vld [vmem:[%s1 + $0x248] sm:$0xff]
  %v122 = vld [vmem:[%s1 + $0x250] sm:$0xff]
  %v123 = vld [vmem:[%s1 + $0x258] sm:$0xff]
  %v124 = vld [vmem:[%s1 + $0x260] sm:$0xff]
  %v125 = vld [vmem:[%s1 + $0x268] sm:$0xff]
  %v126 = vld [vmem:[%s1 + $0x270] sm:$0xff]
  %v127 = vld [vmem:[%s1 + $0x278] sm:$0xff]
  %v128 = vld [vmem:[%s1 + $0x280] sm:$0xff]
  %v129 = vld [vmem:[%s1 + $0x288] sm:$0xff]
  %v130 = vld [vmem:[%s1 + $0x290] sm:$0xff]
  %v131 = vld [vmem:[%s1 + $0x298] sm:$0xff]
  %v132 = vld [vmem:[%s1 + $0x2a0] sm:$0xff]
  %v133 = vld [vmem:[%s1 + $0x2a8] sm:$0xff]
  %v134 = vld [vmem:[%s1 + $0x2b0] sm:$0xff]
  %v135 = vld [vmem:[%s1 + $0x2b8] sm:$0xff]
  %v136 = vld [vmem:[%s1 + $0x2c0] sm:$0xff]
  %v137 = vld [vmem:[%s1 + $0x2c8] sm:$0xff]
  %v138 = vld [vmem:[%s1 + $0x2d0] sm:$0xff]
  %v139 = vld [vmem:[%s1 + $0x2d8] sm:$0xff]
  %v140 = vld [vmem:[%s1 + $0x2e0] sm:$0xff]
  %v141 = vld [vmem:[%s1 + $0x2e8] sm:$0xff]
  %v142 = vld [vmem:[%s1 + $0x2f0] sm:$0xff]
  %v143 = vld [vmem:[%s1 + $0x2f8] sm:$0xff]
  %v144 = vld [vmem:[%s1 + $0x300] sm:$0xff]
  %v145 = vld [vmem:[%s1 + $0x308] sm:$0xff]
  %v146 = vld [vmem:[%s1 + $0x310] sm:$0xff]
  %v147 = vld [vmem:[%s1 + $0x318] sm:$0xff]
  %v148 = vld [vmem:[%s1 + $0x320] sm:$0xff]
  %v149 = vld [vmem:[%s1 + $0x328] sm:$0xff]
  %v150 = vld [vmem:[%s1 + $0x330] sm:$0xff]
  %v151 = vld [vmem:[%s1 + $0x338] sm:$0xff]
  %v152 = vld [vmem:[%s1 + $0x340] sm:$0xff]
  %v153 = vld [vmem:[%s1 + $0x348] sm:$0xff]
  %v154 = vld [vmem:[%s1 + $0x350] sm:$0xff]
  %v155 = vld [vmem:[%s1 + $0x358] sm:$0xff]
  %v156 = vld [vmem:[%s1 + $0x360] sm:$0xff]
  %v157 = vld [vmem:[%s1 + $0x368] sm:$0xff]
  %v158 = vld [vmem:[%s1 + $0x370] sm:$0xff]
  %v159 = vld [vmem:[%s1 + $0x378] sm:$0xff]
  %v160 = vld [vmem:[%s1 + $0x380] sm:$0xff]
  %v161 = vld [vmem:[%s1 + $0x388] sm:$0xff]
  %v162 = vld [vmem:[%s1 + $0x390] sm:$0xff]
  %v163 = vld [vmem:[%s1 + $0x398] sm:$0xff]
  %v164 = vld [vmem:[%s1 + $0x3a0] sm:$0xff]
  %v165 = vld [vmem:[%s1 + $0x3a8] sm:$0xff]
  %v166 = vld [vmem:[%s1 + $0x3b0] sm:$0xff]
  %v167 = vld [vmem:[%s1 + $0x3b8] sm:$0xff]
  %v168 = vld [vmem:[%s1 + $0x3c0] sm:$0xff]
  %v169 = vld [vmem:[%s1 + $0x3c8] sm:$0xff]
  %v170 = vld [vmem:[%s1 + $0x3d0] sm:$0xff]
  %v171 = vld [vmem:[%s1 + $0x3d8] sm:$0xff]
  %v172 = vld [vmem:[%s1 + $0x3e0] sm:$0xff]
  %v173 = vld [vmem:[%s1 + $0x3e8] sm:$0xff]
  %v174 = vld [vmem:[%s1 + $0x3f0] sm:$0xff]
  %v175 = vld [vmem:[%s1 + $0x3f8] sm:$0xff]
  %v176 = vld [vmem:[%s1 + $0x400] sm:$0xff]
  %v177 = vld [vmem:[%s1 + $0x408] sm:$0xff]
  %v178 = vld [vmem:[%s1 + $0x410] sm:$0xff]
  %v179 = vld [vmem:[%s1 + $0x418] sm:$0xff]
  %v180 = vld [vmem:[%s1 + $0x420] sm:$0xff]
  %v181 = vld [vmem:[%s1 + $0x428] sm:$0xff]
  %v182 = vld [vmem:[%s1 + $0x430] sm:$0xff]
  %v183 = vld [vmem:[%s1 + $0x438] sm:$0xff]
  %v184 = vld [vmem:[%s1 + $0x440] sm:$0xff]
  %v185 = vld [vmem:[%s1 + $0x448] sm:$0xff]
  %v186 = vld [vmem:[%s1 + $0x450] sm:$0xff]
  %v187 = vld [vmem:[%s1 + $0x458] sm:$0xff]
  %v188 = vld [vmem:[%s1 + $0x460] sm:$0xff]
  %v189 = vld [vmem:[%s1 + $0x468] sm:$0xff]
  %v190 = vld [vmem:[%s1 + $0x470] sm:$0xff]
  %v191 = vld [vmem:[%s1 + $0x478] sm:$0xff]
  %v192 = vld [vmem:[%s1 + $0x480] sm:$0xff]
  %v193 = vld [vmem:[%s1 + $0x488] sm:$0xff]
  %v194 = vld [vmem:[%s1 + $0x490] sm:$0xff]
  %v195 = vld [vmem:[%s1 + $0x498] sm:$0xff]
  %v196 = vld [vmem:[%s1 + $0x4a0] sm:$0xff]
  %v197 = vld [vmem:[%s1 + $0x4a8] sm:$0xff]
  %v198 = vld [vmem:[%s1 + $0x4b0] sm:$0xff]
  %v199 = vld [vmem:[%s1 + $0x4b8] sm:$0xff]
  %v200 = vld [vmem:[%s1 + $0x4c0] sm:$0xff]
  %v201 = vld [vmem:[%s1 + $0x4c8] sm:$0xff]
  %v202 = vld [vmem:[%s1 + $0x4d0] sm:$0xff]
  %v203 = vld [vmem:[%s1 + $0x4d8] sm:$0xff]
  %v204 = vld [vmem:[%s1 + $0x4e0] sm:$0xff]
  %v205 = vld [vmem:[%s1 + $0x4e8] sm:$0xff]
  %v206 = vld [vmem:[%s1 + $0x4f0] sm:$0xff]
  %v207 = vld [vmem:[%s1 + $0x4f8] sm:$0xff]
  %v208 = vld [vmem:[%s1 + $0x500] sm:$0xff]
  %v209 = vld [vmem:[%s1 + $0x508] sm:$0xff]
  %v210 = vld [vmem:[%s1 + $0x510] sm:$0xff]
  %v211 = vld [vmem:[%s1 + $0x518] sm:$0xff]
  %v212 = vld [vmem:[%s1 + $0x520] sm:$0xff]
  %v213 = vld [vmem:[%s1 + $0x528] sm:$0xff]
  %v214 = vld [vmem:[%s1 + $0x530] sm:$0xff]
  %v215 = vld [vmem:[%s1 + $0x538] sm:$0xff]
  %v216 = vld [vmem:[%s1 + $0x540] sm:$0xff]
  %v217 = vld [vmem:[%s1 + $0x548] sm:$0xff]
  %v218 = vld [vmem:[%s1 + $0x550] sm:$0xff]
  %v219 = vld [vmem:[%s1 + $0x558] sm:$0xff]
  %v220 = vld [vmem:[%s1 + $0x560] sm:$0xff]
  %v221 = vld [vmem:[%s1 + $0x568] sm:$0xff]
  %v222 = vld [vmem:[%s1 + $0x570] sm:$0xff]
  %v223 = vld [vmem:[%s1 + $0x578] sm:$0xff]
  %v224 = vld [vmem:[%s1 + $0x580] sm:$0xff]
  %v225 = vld [vmem:[%s1 + $0x588] sm:$0xff]
  %v226 = vld [vmem:[%s1 + $0x590] sm:$0xff]
  %v227 = vld [vmem:[%s1 + $0x598] sm:$0xff]
  %v228 = vld [vmem:[%s1 + $0x5a0] sm:$0xff]
  %v229 = vld [vmem:[%s1 + $0x5a8] sm:$0xff]
  %v230 = vld [vmem:[%s1 + $0x5b0] sm:$0xff]
  %v231 = vld [vmem:[%s1 + $0x5b8] sm:$0xff]
  %v232 = vld [vmem:[%s1 + $0x5c0] sm:$0xff]
  %v233 = vld [vmem:[%s1 + $0x5c8] sm:$0xff]
  %v234 = vld [vmem:[%s1 + $0x5d0] sm:$0xff]
  %v235 = vld [vmem:[%s1 + $0x5d8] sm:$0xff]
  %v236 = vld [vmem:[%s1 + $0x5e0] sm:$0xff]
  %v237 = vld [vmem:[%s1 + $0x5e8] sm:$0xff]
  %v238 = vld [vmem:[%s1 + $0x5f0] sm:$0xff]
  %v239 = vld [vmem:[%s1 + $0x5f8] sm:$0xff]
  %v240 = vld [vmem:[%s1 + $0x600] sm:$0xff]
  %v241 = vld [vmem:[%s1 + $0x608] sm:$0xff]
  %v242 = vld [vmem:[%s1 + $0x610] sm:$0xff]
  %v243 = vld [vmem:[%s1 + $0x618] sm:$0xff]
  %v244 = vld [vmem:[%s2] sm:$0xf]
  %v246 = vperm.slane %v244, 0
  %v247 = vperm.slane %v244, 1
  %v248 = vperm.slane %v244, 2
  %v249 = vperm.slane %v244, 3
  %v450 = vunpack.c.l.b16 %v48
  %v451 = vunpack.c.h.b16 %v48
  %v452 = vunpack.c.l.b16 %v49
  %v453 = vunpack.c.h.b16 %v49
  %v454 = vunpack.c.l.b16 %v50
  %v455 = vunpack.c.h.b16 %v50
  %v456 = vunpack.c.l.b16 %v51
  %v457 = vunpack.c.h.b16 %v51
  %v458 = vunpack.c.l.b16 %v52
  %v459 = vunpack.c.h.b16 %v52
  %v460 = vunpack.c.l.b16 %v53
  %v461 = vunpack.c.h.b16 %v53
  %v462 = vunpack.c.l.b16 %v54
  %v463 = vunpack.c.h.b16 %v54
  %v464 = vunpack.c.l.b16 %v55
  %v465 = vunpack.c.h.b16 %v55
  %v466 = vunpack.c.l.b16 %v56
  %v467 = vunpack.c.h.b16 %v56
  %v468 = vunpack.c.l.b16 %v57
  %v469 = vunpack.c.h.b16 %v57
  %v470 = vunpack.c.l.b16 %v58
  %v471 = vunpack.c.h.b16 %v58
  %v472 = vunpack.c.l.b16 %v59
  %v473 = vunpack.c.h.b16 %v59
  %v474 = vunpack.c.l.b16 %v60
  %v475 = vunpack.c.h.b16 %v60
  %v476 = vunpack.c.l.b16 %v61
  %v477 = vunpack.c.h.b16 %v61
  %v478 = vunpack.c.l.b16 %v62
  %v479 = vunpack.c.h.b16 %v62
  %v480 = vunpack.c.l.b16 %v63
  %v481 = vunpack.c.h.b16 %v63
  %v482 = vunpack.c.l.b16 %v64
  %v483 = vunpack.c.h.b16 %v64
  %v484 = vunpack.c.l.b16 %v65
  %v485 = vunpack.c.h.b16 %v65
  %v486 = vunpack.c.l.b16 %v66
  %v487 = vunpack.c.h.b16 %v66
  %v488 = vunpack.c.l.b16 %v67
  %v489 = vunpack.c.h.b16 %v67
  %v490 = vunpack.c.l.b16 %v68
  %v491 = vunpack.c.h.b16 %v68
  %v492 = vunpack.c.l.b16 %v69
  %v493 = vunpack.c.h.b16 %v69
  %v494 = vunpack.c.l.b16 %v70
  %v495 = vunpack.c.h.b16 %v70
  %v496 = vunpack.c.l.b16 %v71
  %v497 = vunpack.c.h.b16 %v71
  %v498 = vunpack.c.l.b16 %v72
  %v499 = vunpack.c.h.b16 %v72
  %v500 = vunpack.c.l.b16 %v73
  %v501 = vunpack.c.h.b16 %v73
  %v502 = vunpack.c.l.b16 %v74
  %v503 = vunpack.c.h.b16 %v74
  %v504 = vunpack.c.l.b16 %v75
  %v505 = vunpack.c.h.b16 %v75
  %v506 = vunpack.c.l.b16 %v76
  %v507 = vunpack.c.h.b16 %v76
  %v508 = vunpack.c.l.b16 %v77
  %v509 = vunpack.c.h.b16 %v77
  %v510 = vunpack.c.l.b16 %v78
  %v511 = vunpack.c.h.b16 %v78
  %v512 = vunpack.c.l.b16 %v79
  %v513 = vunpack.c.h.b16 %v79
  %v514 = vunpack.c.l.b16 %v80
  %v515 = vunpack.c.h.b16 %v80
  %v516 = vunpack.c.l.b16 %v81
  %v517 = vunpack.c.h.b16 %v81
  %v518 = vunpack.c.l.b16 %v82
  %v519 = vunpack.c.h.b16 %v82
  %v520 = vunpack.c.l.b16 %v83
  %v521 = vunpack.c.h.b16 %v83
  %v522 = vunpack.c.l.b16 %v84
  %v523 = vunpack.c.h.b16 %v84
  %v524 = vunpack.c.l.b16 %v85
  %v525 = vunpack.c.h.b16 %v85
  %v526 = vunpack.c.l.b16 %v86
  %v527 = vunpack.c.h.b16 %v86
  %v528 = vunpack.c.l.b16 %v87
  %v529 = vunpack.c.h.b16 %v87
  %v530 = vunpack.c.l.b16 %v88
  %v531 = vunpack.c.h.b16 %v88
  %v532 = vunpack.c.l.b16 %v89
  %v533 = vunpack.c.h.b16 %v89
  %v534 = vunpack.c.l.b16 %v90
  %v535 = vunpack.c.h.b16 %v90
  %v536 = vunpack.c.l.b16 %v91
  %v537 = vunpack.c.h.b16 %v91
  %v538 = vunpack.c.l.b16 %v92
  %v539 = vunpack.c.h.b16 %v92
  %v540 = vunpack.c.l.b16 %v93
  %v541 = vunpack.c.h.b16 %v93
  %v542 = vunpack.c.l.b16 %v94
  %v543 = vunpack.c.h.b16 %v94
  %v544 = vunpack.c.l.b16 %v95
  %v545 = vunpack.c.h.b16 %v95
  %v546 = vunpack.c.l.b16 %v96
  %v547 = vunpack.c.h.b16 %v96
  %v548 = vunpack.c.l.b16 %v97
  %v549 = vunpack.c.h.b16 %v97
  %v550 = vunpack.c.l.b16 %v98
  %v551 = vunpack.c.h.b16 %v98
  %v552 = vunpack.c.l.b16 %v99
  %v553 = vunpack.c.h.b16 %v99
  %v554 = vunpack.c.l.b16 %v100
  %v555 = vunpack.c.h.b16 %v100
  %v556 = vunpack.c.l.b16 %v101
  %v557 = vunpack.c.h.b16 %v101
  %v558 = vunpack.c.l.b16 %v102
  %v559 = vunpack.c.h.b16 %v102
  %v560 = vunpack.c.l.b16 %v103
  %v561 = vunpack.c.h.b16 %v103
  %v562 = vunpack.c.l.b16 %v104
  %v563 = vunpack.c.h.b16 %v104
  %v564 = vunpack.c.l.b16 %v105
  %v565 = vunpack.c.h.b16 %v105
  %v566 = vunpack.c.l.b16 %v106
  %v567 = vunpack.c.h.b16 %v106
  %v568 = vunpack.c.l.b16 %v107
  %v569 = vunpack.c.h.b16 %v107
  %v570 = vunpack.c.l.b16 %v108
  %v571 = vunpack.c.h.b16 %v108
  %v572 = vunpack.c.l.b16 %v109
  %v573 = vunpack.c.h.b16 %v109
  %v574 = vunpack.c.l.b16 %v110
  %v575 = vunpack.c.h.b16 %v110
  %v576 = vunpack.c.l.b16 %v111
  %v577 = vunpack.c.h.b16 %v111
  %v578 = vunpack.c.l.b16 %v112
  %v579 = vunpack.c.h.b16 %v112
  %v580 = vunpack.c.l.b16 %v113
  %v581 = vunpack.c.h.b16 %v113
  %v582 = vunpack.c.l.b16 %v114
  %v583 = vunpack.c.h.b16 %v114
  %v584 = vunpack.c.l.b16 %v115
  %v585 = vunpack.c.h.b16 %v115
  %v586 = vunpack.c.l.b16 %v116
  %v587 = vunpack.c.h.b16 %v116
  %v588 = vunpack.c.l.b16 %v117
  %v589 = vunpack.c.h.b16 %v117
  %v590 = vunpack.c.l.b16 %v118
  %v591 = vunpack.c.h.b16 %v118
  %v592 = vunpack.c.l.b16 %v119
  %v593 = vunpack.c.h.b16 %v119
  %v594 = vunpack.c.l.b16 %v120
  %v595 = vunpack.c.h.b16 %v120
  %v596 = vunpack.c.l.b16 %v121
  %v597 = vunpack.c.h.b16 %v121
  %v598 = vunpack.c.l.b16 %v122
  %v599 = vunpack.c.h.b16 %v122
  %v600 = vunpack.c.l.b16 %v123
  %v601 = vunpack.c.h.b16 %v123
  %v602 = vunpack.c.l.b16 %v124
  %v603 = vunpack.c.h.b16 %v124
  %v604 = vunpack.c.l.b16 %v125
  %v605 = vunpack.c.h.b16 %v125
  %v606 = vunpack.c.l.b16 %v126
  %v607 = vunpack.c.h.b16 %v126
  %v608 = vunpack.c.l.b16 %v127
  %v609 = vunpack.c.h.b16 %v127
  %v610 = vunpack.c.l.b16 %v128
  %v611 = vunpack.c.h.b16 %v128
  %v612 = vunpack.c.l.b16 %v129
  %v613 = vunpack.c.h.b16 %v129
  %v614 = vunpack.c.l.b16 %v130
  %v615 = vunpack.c.h.b16 %v130
  %v616 = vunpack.c.l.b16 %v131
  %v617 = vunpack.c.h.b16 %v131
  %v618 = vunpack.c.l.b16 %v132
  %v619 = vunpack.c.h.b16 %v132
  %v620 = vunpack.c.l.b16 %v133
  %v621 = vunpack.c.h.b16 %v133
  %v622 = vunpack.c.l.b16 %v134
  %v623 = vunpack.c.h.b16 %v134
  %v624 = vunpack.c.l.b16 %v135
  %v625 = vunpack.c.h.b16 %v135
  %v626 = vunpack.c.l.b16 %v136
  %v627 = vunpack.c.h.b16 %v136
  %v628 = vunpack.c.l.b16 %v137
  %v629 = vunpack.c.h.b16 %v137
  %v630 = vunpack.c.l.b16 %v138
  %v631 = vunpack.c.h.b16 %v138
  %v632 = vunpack.c.l.b16 %v139
  %v633 = vunpack.c.h.b16 %v139
  %v634 = vunpack.c.l.b16 %v140
  %v635 = vunpack.c.h.b16 %v140
  %v636 = vunpack.c.l.b16 %v141
  %v637 = vunpack.c.h.b16 %v141
  %v638 = vunpack.c.l.b16 %v142
  %v639 = vunpack.c.h.b16 %v142
  %v640 = vunpack.c.l.b16 %v143
  %v641 = vunpack.c.h.b16 %v143
  %v642 = vunpack.c.l.b16 %v144
  %v643 = vunpack.c.h.b16 %v144
  %v644 = vunpack.c.l.b16 %v145
  %v645 = vunpack.c.h.b16 %v145
  %v646 = vunpack.c.l.b16 %v146
  %v647 = vunpack.c.h.b16 %v146
  %v648 = vunpack.c.l.b16 %v147
  %v649 = vunpack.c.h.b16 %v147
  %v650 = vunpack.c.l.b16 %v148
  %v651 = vunpack.c.h.b16 %v148
  %v652 = vunpack.c.l.b16 %v149
  %v653 = vunpack.c.h.b16 %v149
  %v654 = vunpack.c.l.b16 %v150
  %v655 = vunpack.c.h.b16 %v150
  %v656 = vunpack.c.l.b16 %v151
  %v657 = vunpack.c.h.b16 %v151
  %v658 = vunpack.c.l.b16 %v152
  %v659 = vunpack.c.h.b16 %v152
  %v660 = vunpack.c.l.b16 %v153
  %v661 = vunpack.c.h.b16 %v153
  %v662 = vunpack.c.l.b16 %v154
  %v663 = vunpack.c.h.b16 %v154
  %v664 = vunpack.c.l.b16 %v155
  %v665 = vunpack.c.h.b16 %v155
  %v666 = vunpack.c.l.b16 %v156
  %v667 = vunpack.c.h.b16 %v156
  %v668 = vunpack.c.l.b16 %v157
  %v669 = vunpack.c.h.b16 %v157
  %v670 = vunpack.c.l.b16 %v158
  %v671 = vunpack.c.h.b16 %v158
  %v672 = vunpack.c.l.b16 %v159
  %v673 = vunpack.c.h.b16 %v159
  %v674 = vunpack.c.l.b16 %v160
  %v675 = vunpack.c.h.b16 %v160
  %v676 = vunpack.c.l.b16 %v161
  %v677 = vunpack.c.h.b16 %v161
  %v678 = vunpack.c.l.b16 %v162
  %v679 = vunpack.c.h.b16 %v162
  %v680 = vunpack.c.l.b16 %v163
  %v681 = vunpack.c.h.b16 %v163
  %v682 = vunpack.c.l.b16 %v164
  %v683 = vunpack.c.h.b16 %v164
  %v684 = vunpack.c.l.b16 %v165
  %v685 = vunpack.c.h.b16 %v165
  %v686 = vunpack.c.l.b16 %v166
  %v687 = vunpack.c.h.b16 %v166
  %v688 = vunpack.c.l.b16 %v167
  %v689 = vunpack.c.h.b16 %v167
  %v690 = vunpack.c.l.b16 %v168
  %v691 = vunpack.c.h.b16 %v168
  %v692 = vunpack.c.l.b16 %v169
  %v693 = vunpack.c.h.b16 %v169
  %v694 = vunpack.c.l.b16 %v170
  %v695 = vunpack.c.h.b16 %v170
  %v696 = vunpack.c.l.b16 %v171
  %v697 = vunpack.c.h.b16 %v171
  %v698 = vunpack.c.l.b16 %v172
  %v699 = vunpack.c.h.b16 %v172
  %v700 = vunpack.c.l.b16 %v173
  %v701 = vunpack.c.h.b16 %v173
  %v702 = vunpack.c.l.b16 %v174
  %v703 = vunpack.c.h.b16 %v174
  %v704 = vunpack.c.l.b16 %v175
  %v705 = vunpack.c.h.b16 %v175
  %v706 = vunpack.c.l.b16 %v176
  %v707 = vunpack.c.h.b16 %v176
  %v708 = vunpack.c.l.b16 %v177
  %v709 = vunpack.c.h.b16 %v177
  %v710 = vunpack.c.l.b16 %v178
  %v711 = vunpack.c.h.b16 %v178
  %v712 = vunpack.c.l.b16 %v179
  %v713 = vunpack.c.h.b16 %v179
  %v714 = vunpack.c.l.b16 %v180
  %v715 = vunpack.c.h.b16 %v180
  %v716 = vunpack.c.l.b16 %v181
  %v717 = vunpack.c.h.b16 %v181
  %v718 = vunpack.c.l.b16 %v182
  %v719 = vunpack.c.h.b16 %v182
  %v720 = vunpack.c.l.b16 %v183
  %v721 = vunpack.c.h.b16 %v183
  %v722 = vunpack.c.l.b16 %v184
  %v723 = vunpack.c.h.b16 %v184
  %v724 = vunpack.c.l.b16 %v185
  %v725 = vunpack.c.h.b16 %v185
  %v726 = vunpack.c.l.b16 %v186
  %v727 = vunpack.c.h.b16 %v186
  %v728 = vunpack.c.l.b16 %v187
  %v729 = vunpack.c.h.b16 %v187
  %v730 = vunpack.c.l.b16 %v188
  %v731 = vunpack.c.h.b16 %v188
  %v732 = vunpack.c.l.b16 %v189
  %v733 = vunpack.c.h.b16 %v189
  %v734 = vunpack.c.l.b16 %v190
  %v735 = vunpack.c.h.b16 %v190
  %v736 = vunpack.c.l.b16 %v191
  %v737 = vunpack.c.h.b16 %v191
  %v738 = vunpack.c.l.b16 %v192
  %v739 = vunpack.c.h.b16 %v192
  %v740 = vunpack.c.l.b16 %v193
  %v741 = vunpack.c.h.b16 %v193
  %v742 = vunpack.c.l.b16 %v194
  %v743 = vunpack.c.h.b16 %v194
  %v744 = vunpack.c.l.b16 %v195
  %v745 = vunpack.c.h.b16 %v195
  %v746 = vunpack.c.l.b16 %v196
  %v747 = vunpack.c.h.b16 %v196
  %v748 = vunpack.c.l.b16 %v197
  %v749 = vunpack.c.h.b16 %v197
  %v750 = vunpack.c.l.b16 %v198
  %v751 = vunpack.c.h.b16 %v198
  %v752 = vunpack.c.l.b16 %v199
  %v753 = vunpack.c.h.b16 %v199
  %v754 = vunpack.c.l.b16 %v200
  %v755 = vunpack.c.h.b16 %v200
  %v756 = vunpack.c.l.b16 %v201
  %v757 = vunpack.c.h.b16 %v201
  %v758 = vunpack.c.l.b16 %v202
  %v759 = vunpack.c.h.b16 %v202
  %v760 = vunpack.c.l.b16 %v203
  %v761 = vunpack.c.h.b16 %v203
  %v762 = vunpack.c.l.b16 %v204
  %v763 = vunpack.c.h.b16 %v204
  %v764 = vunpack.c.l.b16 %v205
  %v765 = vunpack.c.h.b16 %v205
  %v766 = vunpack.c.l.b16 %v206
  %v767 = vunpack.c.h.b16 %v206
  %v768 = vunpack.c.l.b16 %v207
  %v769 = vunpack.c.h.b16 %v207
  %v770 = vunpack.c.l.b16 %v208
  %v771 = vunpack.c.h.b16 %v208
  %v772 = vunpack.c.l.b16 %v209
  %v773 = vunpack.c.h.b16 %v209
  %v774 = vunpack.c.l.b16 %v210
  %v775 = vunpack.c.h.b16 %v210
  %v776 = vunpack.c.l.b16 %v211
  %v777 = vunpack.c.h.b16 %v211
  %v778 = vunpack.c.l.b16 %v212
  %v779 = vunpack.c.h.b16 %v212
  %v780 = vunpack.c.l.b16 %v213
  %v781 = vunpack.c.h.b16 %v213
  %v782 = vunpack.c.l.b16 %v214
  %v783 = vunpack.c.h.b16 %v214
  %v784 = vunpack.c.l.b16 %v215
  %v785 = vunpack.c.h.b16 %v215
  %v786 = vunpack.c.l.b16 %v216
  %v787 = vunpack.c.h.b16 %v216
  %v788 = vunpack.c.l.b16 %v217
  %v789 = vunpack.c.h.b16 %v217
  %v790 = vunpack.c.l.b16 %v218
  %v791 = vunpack.c.h.b16 %v218
  %v792 = vunpack.c.l.b16 %v219
  %v793 = vunpack.c.h.b16 %v219
  %v794 = vunpack.c.l.b16 %v220
  %v795 = vunpack.c.h.b16 %v220
  %v796 = vunpack.c.l.b16 %v221
  %v797 = vunpack.c.h.b16 %v221
  %v798 = vunpack.c.l.b16 %v222
  %v799 = vunpack.c.h.b16 %v222
  %v800 = vunpack.c.l.b16 %v223
  %v801 = vunpack.c.h.b16 %v223
  %v802 = vunpack.c.l.b16 %v224
  %v803 = vunpack.c.h.b16 %v224
  %v804 = vunpack.c.l.b16 %v225
  %v805 = vunpack.c.h.b16 %v225
  %v806 = vunpack.c.l.b16 %v226
  %v807 = vunpack.c.h.b16 %v226
  %v808 = vunpack.c.l.b16 %v227
  %v809 = vunpack.c.h.b16 %v227
  %v810 = vunpack.c.l.b16 %v228
  %v811 = vunpack.c.h.b16 %v228
  %v812 = vunpack.c.l.b16 %v229
  %v813 = vunpack.c.h.b16 %v229
  %v814 = vunpack.c.l.b16 %v230
  %v815 = vunpack.c.h.b16 %v230
  %v816 = vunpack.c.l.b16 %v231
  %v817 = vunpack.c.h.b16 %v231
  %v818 = vunpack.c.l.b16 %v232
  %v819 = vunpack.c.h.b16 %v232
  %v820 = vunpack.c.l.b16 %v233
  %v821 = vunpack.c.h.b16 %v233
  %v822 = vunpack.c.l.b16 %v234
  %v823 = vunpack.c.h.b16 %v234
  %v824 = vunpack.c.l.b16 %v235
  %v825 = vunpack.c.h.b16 %v235
  %v826 = vunpack.c.l.b16 %v236
  %v827 = vunpack.c.h.b16 %v236
  %v828 = vunpack.c.l.b16 %v237
  %v829 = vunpack.c.h.b16 %v237
  %v830 = vunpack.c.l.b16 %v238
  %v831 = vunpack.c.h.b16 %v238
  %v832 = vunpack.c.l.b16 %v239
  %v833 = vunpack.c.h.b16 %v239
  %v834 = vunpack.c.l.b16 %v240
  %v835 = vunpack.c.h.b16 %v240
  %v836 = vunpack.c.l.b16 %v241
  %v837 = vunpack.c.h.b16 %v241
  %v838 = vunpack.c.l.b16 %v242
  %v839 = vunpack.c.h.b16 %v242
  %v840 = vunpack.c.l.b16 %v243
  %v841 = vunpack.c.h.b16 %v243
  %v842 = vpack.c.b16 %v454, %v450
  %v843 = vpack.c.b16 %v455, %v451
  %v844 = vpack.c.b16 %v456, %v452
  %v845 = vpack.c.b16 %v457, %v453
  %v846 = vpack.c.b16 %v462, %v458
  %v847 = vpack.c.b16 %v463, %v459
  %v848 = vpack.c.b16 %v464, %v460
  %v849 = vpack.c.b16 %v465, %v461
  %v850 = vpack.c.b16 %v470, %v466
  %v851 = vpack.c.b16 %v471, %v467
  %v852 = vpack.c.b16 %v472, %v468
  %v853 = vpack.c.b16 %v473, %v469
  %v854 = vpack.c.b16 %v478, %v474
  %v855 = vpack.c.b16 %v479, %v475
  %v856 = vpack.c.b16 %v480, %v476
  %v857 = vpack.c.b16 %v481, %v477
  %v858 = vpack.c.b16 %v486, %v482
  %v859 = vpack.c.b16 %v487, %v483
  %v860 = vpack.c.b16 %v488, %v484
  %v861 = vpack.c.b16 %v489, %v485
  %v862 = vpack.c.b16 %v494, %v490
  %v863 = vpack.c.b16 %v495, %v491
  %v864 = vpack.c.b16 %v496, %v492
  %v865 = vpack.c.b16 %v497, %v493
  %v866 = vpack.c.b16 %v502, %v498
  %v867 = vpack.c.b16 %v503, %v499
  %v868 = vpack.c.b16 %v504, %v500
  %v869 = vpack.c.b16 %v505, %v501
  %v870 = vpack.c.b16 %v510, %v506
  %v871 = vpack.c.b16 %v511, %v507
  %v872 = vpack.c.b16 %v512, %v508
  %v873 = vpack.c.b16 %v513, %v509
  %v874 = vpack.c.b16 %v518, %v514
  %v875 = vpack.c.b16 %v519, %v515
  %v876 = vpack.c.b16 %v520, %v516
  %v877 = vpack.c.b16 %v521, %v517
  %v878 = vpack.c.b16 %v526, %v522
  %v879 = vpack.c.b16 %v527, %v523
  %v880 = vpack.c.b16 %v528, %v524
  %v881 = vpack.c.b16 %v529, %v525
  %v882 = vpack.c.b16 %v534, %v530
  %v883 = vpack.c.b16 %v535, %v531
  %v884 = vpack.c.b16 %v536, %v532
  %v885 = vpack.c.b16 %v537, %v533
  %v886 = vpack.c.b16 %v542, %v538
  %v887 = vpack.c.b16 %v543, %v539
  %v888 = vpack.c.b16 %v544, %v540
  %v889 = vpack.c.b16 %v545, %v541
  %v890 = vpack.c.b16 %v550, %v546
  %v891 = vpack.c.b16 %v551, %v547
  %v892 = vpack.c.b16 %v552, %v548
  %v893 = vpack.c.b16 %v553, %v549
  %v894 = vpack.c.b16 %v558, %v554
  %v895 = vpack.c.b16 %v559, %v555
  %v896 = vpack.c.b16 %v560, %v556
  %v897 = vpack.c.b16 %v561, %v557
  %v898 = vpack.c.b16 %v566, %v562
  %v899 = vpack.c.b16 %v567, %v563
  %v900 = vpack.c.b16 %v568, %v564
  %v901 = vpack.c.b16 %v569, %v565
  %v902 = vpack.c.b16 %v574, %v570
  %v903 = vpack.c.b16 %v575, %v571
  %v904 = vpack.c.b16 %v576, %v572
  %v905 = vpack.c.b16 %v577, %v573
  %v906 = vpack.c.b16 %v582, %v578
  %v907 = vpack.c.b16 %v583, %v579
  %v908 = vpack.c.b16 %v584, %v580
  %v909 = vpack.c.b16 %v585, %v581
  %v910 = vpack.c.b16 %v590, %v586
  %v911 = vpack.c.b16 %v591, %v587
  %v912 = vpack.c.b16 %v592, %v588
  %v913 = vpack.c.b16 %v593, %v589
  %v914 = vpack.c.b16 %v598, %v594
  %v915 = vpack.c.b16 %v599, %v595
  %v916 = vpack.c.b16 %v600, %v596
  %v917 = vpack.c.b16 %v601, %v597
  %v918 = vpack.c.b16 %v606, %v602
  %v919 = vpack.c.b16 %v607, %v603
  %v920 = vpack.c.b16 %v608, %v604
  %v921 = vpack.c.b16 %v609, %v605
  %v922 = vpack.c.b16 %v614, %v610
  %v923 = vpack.c.b16 %v615, %v611
  %v924 = vpack.c.b16 %v616, %v612
  %v925 = vpack.c.b16 %v617, %v613
  %v926 = vpack.c.b16 %v622, %v618
  %v927 = vpack.c.b16 %v623, %v619
  %v928 = vpack.c.b16 %v624, %v620
  %v929 = vpack.c.b16 %v625, %v621
  %v930 = vpack.c.b16 %v630, %v626
  %v931 = vpack.c.b16 %v631, %v627
  %v932 = vpack.c.b16 %v632, %v628
  %v933 = vpack.c.b16 %v633, %v629
  %v934 = vpack.c.b16 %v638, %v634
  %v935 = vpack.c.b16 %v639, %v635
  %v936 = vpack.c.b16 %v640, %v636
  %v937 = vpack.c.b16 %v641, %v637
  %v938 = vpack.c.b16 %v646, %v642
  %v939 = vpack.c.b16 %v647, %v643
  %v940 = vpack.c.b16 %v648, %v644
  %v941 = vpack.c.b16 %v649, %v645
  %v942 = vpack.c.b16 %v654, %v650
  %v943 = vpack.c.b16 %v655, %v651
  %v944 = vpack.c.b16 %v656, %v652
  %v945 = vpack.c.b16 %v657, %v653
  %v946 = vpack.c.b16 %v662, %v658
  %v947 = vpack.c.b16 %v663, %v659
  %v948 = vpack.c.b16 %v664, %v660
  %v949 = vpack.c.b16 %v665, %v661
  %v950 = vpack.c.b16 %v670, %v666
  %v951 = vpack.c.b16 %v671, %v667
  %v952 = vpack.c.b16 %v672, %v668
  %v953 = vpack.c.b16 %v673, %v669
  %v954 = vpack.c.b16 %v678, %v674
  %v955 = vpack.c.b16 %v679, %v675
  %v956 = vpack.c.b16 %v680, %v676
  %v957 = vpack.c.b16 %v681, %v677
  %v958 = vpack.c.b16 %v686, %v682
  %v959 = vpack.c.b16 %v687, %v683
  %v960 = vpack.c.b16 %v688, %v684
  %v961 = vpack.c.b16 %v689, %v685
  %v962 = vpack.c.b16 %v694, %v690
  %v963 = vpack.c.b16 %v695, %v691
  %v964 = vpack.c.b16 %v696, %v692
  %v965 = vpack.c.b16 %v697, %v693
  %v966 = vpack.c.b16 %v702, %v698
  %v967 = vpack.c.b16 %v703, %v699
  %v968 = vpack.c.b16 %v704, %v700
  %v969 = vpack.c.b16 %v705, %v701
  %v970 = vpack.c.b16 %v710, %v706
  %v971 = vpack.c.b16 %v711, %v707
  %v972 = vpack.c.b16 %v712, %v708
  %v973 = vpack.c.b16 %v713, %v709
  %v974 = vpack.c.b16 %v718, %v714
  %v975 = vpack.c.b16 %v719, %v715
  %v976 = vpack.c.b16 %v720, %v716
  %v977 = vpack.c.b16 %v721, %v717
  %v978 = vpack.c.b16 %v726, %v722
  %v979 = vpack.c.b16 %v727, %v723
  %v980 = vpack.c.b16 %v728, %v724
  %v981 = vpack.c.b16 %v729, %v725
  %v982 = vpack.c.b16 %v734, %v730
  %v983 = vpack.c.b16 %v735, %v731
  %v984 = vpack.c.b16 %v736, %v732
  %v985 = vpack.c.b16 %v737, %v733
  %v986 = vpack.c.b16 %v742, %v738
  %v987 = vpack.c.b16 %v743, %v739
  %v988 = vpack.c.b16 %v744, %v740
  %v989 = vpack.c.b16 %v745, %v741
  %v990 = vpack.c.b16 %v750, %v746
  %v991 = vpack.c.b16 %v751, %v747
  %v992 = vpack.c.b16 %v752, %v748
  %v993 = vpack.c.b16 %v753, %v749
  %v994 = vpack.c.b16 %v758, %v754
  %v995 = vpack.c.b16 %v759, %v755
  %v996 = vpack.c.b16 %v760, %v756
  %v997 = vpack.c.b16 %v761, %v757
  %v998 = vpack.c.b16 %v766, %v762
  %v999 = vpack.c.b16 %v767, %v763
  %v1000 = vpack.c.b16 %v768, %v764
  %v1001 = vpack.c.b16 %v769, %v765
  %v1002 = vpack.c.b16 %v774, %v770
  %v1003 = vpack.c.b16 %v775, %v771
  %v1004 = vpack.c.b16 %v776, %v772
  %v1005 = vpack.c.b16 %v777, %v773
  %v1006 = vpack.c.b16 %v782, %v778
  %v1007 = vpack.c.b16 %v783, %v779
  %v1008 = vpack.c.b16 %v784, %v780
  %v1009 = vpack.c.b16 %v785, %v781
  %v1010 = vpack.c.b16 %v790, %v786
  %v1011 = vpack.c.b16 %v791, %v787
  %v1012 = vpack.c.b16 %v792, %v788
  %v1013 = vpack.c.b16 %v793, %v789
  %v1014 = vpack.c.b16 %v798, %v794
  %v1015 = vpack.c.b16 %v799, %v795
  %v1016 = vpack.c.b16 %v800, %v796
  %v1017 = vpack.c.b16 %v801, %v797
  %v1018 = vpack.c.b16 %v806, %v802
  %v1019 = vpack.c.b16 %v807, %v803
  %v1020 = vpack.c.b16 %v808, %v804
  %v1021 = vpack.c.b16 %v809, %v805
  %v1022 = vpack.c.b16 %v814, %v810
  %v1023 = vpack.c.b16 %v815, %v811
  %v1024 = vpack.c.b16 %v816, %v812
  %v1025 = vpack.c.b16 %v817, %v813
  %v1026 = vpack.c.b16 %v822, %v818
  %v1027 = vpack.c.b16 %v823, %v819
  %v1028 = vpack.c.b16 %v824, %v820
  %v1029 = vpack.c.b16 %v825, %v821
  %v1030 = vpack.c.b16 %v830, %v826
  %v1031 = vpack.c.b16 %v831, %v827
  %v1032 = vpack.c.b16 %v832, %v828
  %v1033 = vpack.c.b16 %v833, %v829
  %v1034 = vpack.c.b16 %v838, %v834
  %v1035 = vpack.c.b16 %v839, %v835
  %v1036 = vpack.c.b16 %v840, %v836
  %v1037 = vpack.c.b16 %v841, %v837
  %vm1234 = vcmask 130048
  %v1236 = vsel %vm1234, %v47, 0
  %1238 = vmatpush.bf16.msra.mxu0 %v870
  %1239 = vmatpush.bf16.msra.mxu0 %v866
  %1240 = vmatpush.bf16.msra.mxu0 %v862
  %1241 = vmatpush.bf16.msra.mxu0 %v858
  %1242 = vmatpush.bf16.msra.mxu0 %v854
  %1243 = vmatpush.bf16.msra.mxu0 %v850
  %1244 = vmatpush.bf16.msra.mxu0 %v846
  %1245 = vmatpush.bf16.msra.mxu0 %v842
  %1246 = vmatmul.bf16.gmra.mxu0 %v41
  %v1247 = vpop.f32.mrf.mxu0
  %v1248 = vadd.f32 %v246, %v1247
  %v1249 = vpop.f32.mrf.mxu0
  %v1250 = vadd.f32 %v246, %v1249
  %1251 = vdwg.mxu0
  %1252 = vmatpush.bf16.msra.mxu0 %v902
  %1253 = vmatpush.bf16.msra.mxu0 %v898
  %1254 = vmatpush.bf16.msra.mxu0 %v894
  %1255 = vmatpush.bf16.msra.mxu0 %v890
  %1256 = vmatpush.bf16.msra.mxu0 %v886
  %1257 = vmatpush.bf16.msra.mxu0 %v882
  %1258 = vmatpush.bf16.msra.mxu0 %v878
  %1259 = vmatpush.bf16.msra.mxu0 %v874
  %1260 = vmatmul.bf16.gmra.mxu0 %v42
  %v1261 = vpop.f32.mrf.mxu0
  %v1262 = vadd.f32 %v1248, %v1261
  %v1263 = vpop.f32.mrf.mxu0
  %v1264 = vadd.f32 %v1250, %v1263
  %1265 = vdwg.mxu0
  %1266 = vmatpush.bf16.msra.mxu0 %v934
  %1267 = vmatpush.bf16.msra.mxu0 %v930
  %1268 = vmatpush.bf16.msra.mxu0 %v926
  %1269 = vmatpush.bf16.msra.mxu0 %v922
  %1270 = vmatpush.bf16.msra.mxu0 %v918
  %1271 = vmatpush.bf16.msra.mxu0 %v914
  %1272 = vmatpush.bf16.msra.mxu0 %v910
  %1273 = vmatpush.bf16.msra.mxu0 %v906
  %1274 = vmatmul.bf16.gmra.mxu0 %v43
  %v1275 = vpop.f32.mrf.mxu0
  %v1276 = vadd.f32 %v1262, %v1275
  %v1277 = vpop.f32.mrf.mxu0
  %v1278 = vadd.f32 %v1264, %v1277
  %1279 = vdwg.mxu0
  %1280 = vmatpush.bf16.msra.mxu0 %v966
  %1281 = vmatpush.bf16.msra.mxu0 %v962
  %1282 = vmatpush.bf16.msra.mxu0 %v958
  %1283 = vmatpush.bf16.msra.mxu0 %v954
  %1284 = vmatpush.bf16.msra.mxu0 %v950
  %1285 = vmatpush.bf16.msra.mxu0 %v946
  %1286 = vmatpush.bf16.msra.mxu0 %v942
  %1287 = vmatpush.bf16.msra.mxu0 %v938
  %1288 = vmatmul.bf16.gmra.mxu0 %v44
  %v1289 = vpop.f32.mrf.mxu0
  %v1290 = vadd.f32 %v1276, %v1289
  %v1291 = vpop.f32.mrf.mxu0
  %v1292 = vadd.f32 %v1278, %v1291
  %1293 = vdwg.mxu0
  %1294 = vmatpush.bf16.msra.mxu0 %v998
  %1295 = vmatpush.bf16.msra.mxu0 %v994
  %1296 = vmatpush.bf16.msra.mxu0 %v990
  %1297 = vmatpush.bf16.msra.mxu0 %v986
  %1298 = vmatpush.bf16.msra.mxu0 %v982
  %1299 = vmatpush.bf16.msra.mxu0 %v978
  %1300 = vmatpush.bf16.msra.mxu0 %v974
  %1301 = vmatpush.bf16.msra.mxu0 %v970
  %1302 = vmatmul.bf16.gmra.mxu0 %v45
  %v1303 = vpop.f32.mrf.mxu0
  %v1304 = vadd.f32 %v1290, %v1303
  %v1305 = vpop.f32.mrf.mxu0
  %v1306 = vadd.f32 %v1292, %v1305
  %1307 = vdwg.mxu0
  %1308 = vmatpush.bf16.msra.mxu0 %v1030
  %1309 = vmatpush.bf16.msra.mxu0 %v1026
  %1310 = vmatpush.bf16.msra.mxu0 %v1022
  %1311 = vmatpush.bf16.msra.mxu0 %v1018
  %1312 = vmatpush.bf16.msra.mxu0 %v1014
  %1313 = vmatpush.bf16.msra.mxu0 %v1010
  %1314 = vmatpush.bf16.msra.mxu0 %v1006
  %1315 = vmatpush.bf16.msra.mxu0 %v1002
  %1316 = vmatmul.bf16.gmra.mxu0 %v46
  %v1317 = vpop.f32.mrf.mxu0
  %v1318 = vadd.f32 %v1304, %v1317
  %v1319 = vpop.f32.mrf.mxu0
  %v1320 = vadd.f32 %v1306, %v1319
  %1321 = vdwg.mxu0
  %1322 = vmatpush.bf16.msra.mxu0 0
  %1323 = vmatpush.bf16.msra.mxu0 0
  %1324 = vmatpush.bf16.msra.mxu0 0
  %1325 = vmatpush.bf16.msra.mxu0 0
  %1326 = vmatpush.bf16.msra.mxu0 0
  %1327 = vmatpush.bf16.msra.mxu0 0
  %1328 = vmatpush.bf16.msra.mxu0 0
  %1329 = vmatpush.bf16.msra.mxu0 %v1034
  %1330 = vmatmul.bf16.gmra.mxu0 %v1236
  %v1331 = vpop.f32.mrf.mxu0
  %v1332 = vadd.f32 %v1318, %v1331
  %v1333 = vpop.f32.mrf.mxu0
  %v1334 = vadd.f32 %v1320, %v1333
  %1335 = vdwg.mxu0
  %1336 = vmatpush.bf16.msra.mxu0 %v871
  %1337 = vmatpush.bf16.msra.mxu0 %v867
  %1338 = vmatpush.bf16.msra.mxu0 %v863
  %1339 = vmatpush.bf16.msra.mxu0 %v859
  %1340 = vmatpush.bf16.msra.mxu0 %v855
  %1341 = vmatpush.bf16.msra.mxu0 %v851
  %1342 = vmatpush.bf16.msra.mxu0 %v847
  %1343 = vmatpush.bf16.msra.mxu0 %v843
  %1344 = vmatmul.bf16.gmra.mxu0 %v41
  %v1345 = vpop.f32.mrf.mxu0
  %v1346 = vadd.f32 %v247, %v1345
  %v1347 = vpop.f32.mrf.mxu0
  %v1348 = vadd.f32 %v247, %v1347
  %1349 = vdwg.mxu0
  %1350 = vmatpush.bf16.msra.mxu0 %v903
  %1351 = vmatpush.bf16.msra.mxu0 %v899
  %1352 = vmatpush.bf16.msra.mxu0 %v895
  %1353 = vmatpush.bf16.msra.mxu0 %v891
  %1354 = vmatpush.bf16.msra.mxu0 %v887
  %1355 = vmatpush.bf16.msra.mxu0 %v883
  %1356 = vmatpush.bf16.msra.mxu0 %v879
  %1357 = vmatpush.bf16.msra.mxu0 %v875
  %1358 = vmatmul.bf16.gmra.mxu0 %v42
  %v1359 = vpop.f32.mrf.mxu0
  %v1360 = vadd.f32 %v1346, %v1359
  %v1361 = vpop.f32.mrf.mxu0
  %v1362 = vadd.f32 %v1348, %v1361
  %1363 = vdwg.mxu0
  %1364 = vmatpush.bf16.msra.mxu0 %v935
  %1365 = vmatpush.bf16.msra.mxu0 %v931
  %1366 = vmatpush.bf16.msra.mxu0 %v927
  %1367 = vmatpush.bf16.msra.mxu0 %v923
  %1368 = vmatpush.bf16.msra.mxu0 %v919
  %1369 = vmatpush.bf16.msra.mxu0 %v915
  %1370 = vmatpush.bf16.msra.mxu0 %v911
  %1371 = vmatpush.bf16.msra.mxu0 %v907
  %1372 = vmatmul.bf16.gmra.mxu0 %v43
  %v1373 = vpop.f32.mrf.mxu0
  %v1374 = vadd.f32 %v1360, %v1373
  %v1375 = vpop.f32.mrf.mxu0
  %v1376 = vadd.f32 %v1362, %v1375
  %1377 = vdwg.mxu0
  %1378 = vmatpush.bf16.msra.mxu0 %v967
  %1379 = vmatpush.bf16.msra.mxu0 %v963
  %1380 = vmatpush.bf16.msra.mxu0 %v959
  %1381 = vmatpush.bf16.msra.mxu0 %v955
  %1382 = vmatpush.bf16.msra.mxu0 %v951
  %1383 = vmatpush.bf16.msra.mxu0 %v947
  %1384 = vmatpush.bf16.msra.mxu0 %v943
  %1385 = vmatpush.bf16.msra.mxu0 %v939
  %1386 = vmatmul.bf16.gmra.mxu0 %v44
  %v1387 = vpop.f32.mrf.mxu0
  %v1388 = vadd.f32 %v1374, %v1387
  %v1389 = vpop.f32.mrf.mxu0
  %v1390 = vadd.f32 %v1376, %v1389
  %1391 = vdwg.mxu0
  %1392 = vmatpush.bf16.msra.mxu0 %v999
  %1393 = vmatpush.bf16.msra.mxu0 %v995
  %1394 = vmatpush.bf16.msra.mxu0 %v991
  %1395 = vmatpush.bf16.msra.mxu0 %v987
  %1396 = vmatpush.bf16.msra.mxu0 %v983
  %1397 = vmatpush.bf16.msra.mxu0 %v979
  %1398 = vmatpush.bf16.msra.mxu0 %v975
  %1399 = vmatpush.bf16.msra.mxu0 %v971
  %1400 = vmatmul.bf16.gmra.mxu0 %v45
  %v1401 = vpop.f32.mrf.mxu0
  %v1402 = vadd.f32 %v1388, %v1401
  %v1403 = vpop.f32.mrf.mxu0
  %v1404 = vadd.f32 %v1390, %v1403
  %1405 = vdwg.mxu0
  %1406 = vmatpush.bf16.msra.mxu0 %v1031
  %1407 = vmatpush.bf16.msra.mxu0 %v1027
  %1408 = vmatpush.bf16.msra.mxu0 %v1023
  %1409 = vmatpush.bf16.msra.mxu0 %v1019
  %1410 = vmatpush.bf16.msra.mxu0 %v1015
  %1411 = vmatpush.bf16.msra.mxu0 %v1011
  %1412 = vmatpush.bf16.msra.mxu0 %v1007
  %1413 = vmatpush.bf16.msra.mxu0 %v1003
  %1414 = vmatmul.bf16.gmra.mxu0 %v46
  %v1415 = vpop.f32.mrf.mxu0
  %v1416 = vadd.f32 %v1402, %v1415
  %v1417 = vpop.f32.mrf.mxu0
  %v1418 = vadd.f32 %v1404, %v1417
  %1419 = vdwg.mxu0
  %1420 = vmatpush.bf16.msra.mxu0 0
  %1421 = vmatpush.bf16.msra.mxu0 0
  %1422 = vmatpush.bf16.msra.mxu0 0
  %1423 = vmatpush.bf16.msra.mxu0 0
  %1424 = vmatpush.bf16.msra.mxu0 0
  %1425 = vmatpush.bf16.msra.mxu0 0
  %1426 = vmatpush.bf16.msra.mxu0 0
  %1427 = vmatpush.bf16.msra.mxu0 %v1035
  %1428 = vmatmul.bf16.gmra.mxu0 %v1236
  %v1429 = vpop.f32.mrf.mxu0
  %v1430 = vadd.f32 %v1416, %v1429
  %v1431 = vpop.f32.mrf.mxu0
  %v1432 = vadd.f32 %v1418, %v1431
  %1433 = vdwg.mxu0
  %1434 = vmatpush.bf16.msra.mxu0 %v872
  %1435 = vmatpush.bf16.msra.mxu0 %v868
  %1436 = vmatpush.bf16.msra.mxu0 %v864
  %1437 = vmatpush.bf16.msra.mxu0 %v860
  %1438 = vmatpush.bf16.msra.mxu0 %v856
  %1439 = vmatpush.bf16.msra.mxu0 %v852
  %1440 = vmatpush.bf16.msra.mxu0 %v848
  %1441 = vmatpush.bf16.msra.mxu0 %v844
  %1442 = vmatmul.bf16.gmra.mxu0 %v41
  %v1443 = vpop.f32.mrf.mxu0
  %v1444 = vadd.f32 %v248, %v1443
  %v1445 = vpop.f32.mrf.mxu0
  %v1446 = vadd.f32 %v248, %v1445
  %1447 = vdwg.mxu0
  %1448 = vmatpush.bf16.msra.mxu0 %v904
  %1449 = vmatpush.bf16.msra.mxu0 %v900
  %1450 = vmatpush.bf16.msra.mxu0 %v896
  %1451 = vmatpush.bf16.msra.mxu0 %v892
  %1452 = vmatpush.bf16.msra.mxu0 %v888
  %1453 = vmatpush.bf16.msra.mxu0 %v884
  %1454 = vmatpush.bf16.msra.mxu0 %v880
  %1455 = vmatpush.bf16.msra.mxu0 %v876
  %1456 = vmatmul.bf16.gmra.mxu0 %v42
  %v1457 = vpop.f32.mrf.mxu0
  %v1458 = vadd.f32 %v1444, %v1457
  %v1459 = vpop.f32.mrf.mxu0
  %v1460 = vadd.f32 %v1446, %v1459
  %1461 = vdwg.mxu0
  %1462 = vmatpush.bf16.msra.mxu0 %v936
  %1463 = vmatpush.bf16.msra.mxu0 %v932
  %1464 = vmatpush.bf16.msra.mxu0 %v928
  %1465 = vmatpush.bf16.msra.mxu0 %v924
  %1466 = vmatpush.bf16.msra.mxu0 %v920
  %1467 = vmatpush.bf16.msra.mxu0 %v916
  %1468 = vmatpush.bf16.msra.mxu0 %v912
  %1469 = vmatpush.bf16.msra.mxu0 %v908
  %1470 = vmatmul.bf16.gmra.mxu0 %v43
  %v1471 = vpop.f32.mrf.mxu0
  %v1472 = vadd.f32 %v1458, %v1471
  %v1473 = vpop.f32.mrf.mxu0
  %v1474 = vadd.f32 %v1460, %v1473
  %1475 = vdwg.mxu0
  %1476 = vmatpush.bf16.msra.mxu0 %v968
  %1477 = vmatpush.bf16.msra.mxu0 %v964
  %1478 = vmatpush.bf16.msra.mxu0 %v960
  %1479 = vmatpush.bf16.msra.mxu0 %v956
  %1480 = vmatpush.bf16.msra.mxu0 %v952
  %1481 = vmatpush.bf16.msra.mxu0 %v948
  %1482 = vmatpush.bf16.msra.mxu0 %v944
  %1483 = vmatpush.bf16.msra.mxu0 %v940
  %1484 = vmatmul.bf16.gmra.mxu0 %v44
  %v1485 = vpop.f32.mrf.mxu0
  %v1486 = vadd.f32 %v1472, %v1485
  %v1487 = vpop.f32.mrf.mxu0
  %v1488 = vadd.f32 %v1474, %v1487
  %1489 = vdwg.mxu0
  %1490 = vmatpush.bf16.msra.mxu0 %v1000
  %1491 = vmatpush.bf16.msra.mxu0 %v996
  %1492 = vmatpush.bf16.msra.mxu0 %v992
  %1493 = vmatpush.bf16.msra.mxu0 %v988
  %1494 = vmatpush.bf16.msra.mxu0 %v984
  %1495 = vmatpush.bf16.msra.mxu0 %v980
  %1496 = vmatpush.bf16.msra.mxu0 %v976
  %1497 = vmatpush.bf16.msra.mxu0 %v972
  %1498 = vmatmul.bf16.gmra.mxu0 %v45
  %v1499 = vpop.f32.mrf.mxu0
  %v1500 = vadd.f32 %v1486, %v1499
  %v1501 = vpop.f32.mrf.mxu0
  %v1502 = vadd.f32 %v1488, %v1501
  %1503 = vdwg.mxu0
  %1504 = vmatpush.bf16.msra.mxu0 %v1032
  %1505 = vmatpush.bf16.msra.mxu0 %v1028
  %1506 = vmatpush.bf16.msra.mxu0 %v1024
  %1507 = vmatpush.bf16.msra.mxu0 %v1020
  %1508 = vmatpush.bf16.msra.mxu0 %v1016
  %1509 = vmatpush.bf16.msra.mxu0 %v1012
  %1510 = vmatpush.bf16.msra.mxu0 %v1008
  %1511 = vmatpush.bf16.msra.mxu0 %v1004
  %1512 = vmatmul.bf16.gmra.mxu0 %v46
  %v1513 = vpop.f32.mrf.mxu0
  %v1514 = vadd.f32 %v1500, %v1513
  %v1515 = vpop.f32.mrf.mxu0
  %v1516 = vadd.f32 %v1502, %v1515
  %1517 = vdwg.mxu0
  %1518 = vmatpush.bf16.msra.mxu0 0
  %1519 = vmatpush.bf16.msra.mxu0 0
  %1520 = vmatpush.bf16.msra.mxu0 0
  %1521 = vmatpush.bf16.msra.mxu0 0
  %1522 = vmatpush.bf16.msra.mxu0 0
  %1523 = vmatpush.bf16.msra.mxu0 0
  %1524 = vmatpush.bf16.msra.mxu0 0
  %1525 = vmatpush.bf16.msra.mxu0 %v1036
  %1526 = vmatmul.bf16.gmra.mxu0 %v1236
  %v1527 = vpop.f32.mrf.mxu0
  %v1528 = vadd.f32 %v1514, %v1527
  %v1529 = vpop.f32.mrf.mxu0
  %v1530 = vadd.f32 %v1516, %v1529
  %1531 = vdwg.mxu0
  %1532 = vmatpush.bf16.msra.mxu0 %v873
  %1533 = vmatpush.bf16.msra.mxu0 %v869
  %1534 = vmatpush.bf16.msra.mxu0 %v865
  %1535 = vmatpush.bf16.msra.mxu0 %v861
  %1536 = vmatpush.bf16.msra.mxu0 %v857
  %1537 = vmatpush.bf16.msra.mxu0 %v853
  %1538 = vmatpush.bf16.msra.mxu0 %v849
  %1539 = vmatpush.bf16.msra.mxu0 %v845
  %1540 = vmatmul.bf16.gmra.mxu0 %v41
  %v1541 = vpop.f32.mrf.mxu0
  %v1542 = vadd.f32 %v249, %v1541
  %v1543 = vpop.f32.mrf.mxu0
  %v1544 = vadd.f32 %v249, %v1543
  %1545 = vdwg.mxu0
  %1546 = vmatpush.bf16.msra.mxu0 %v905
  %1547 = vmatpush.bf16.msra.mxu0 %v901
  %1548 = vmatpush.bf16.msra.mxu0 %v897
  %1549 = vmatpush.bf16.msra.mxu0 %v893
  %1550 = vmatpush.bf16.msra.mxu0 %v889
  %1551 = vmatpush.bf16.msra.mxu0 %v885
  %1552 = vmatpush.bf16.msra.mxu0 %v881
  %1553 = vmatpush.bf16.msra.mxu0 %v877
  %1554 = vmatmul.bf16.gmra.mxu0 %v42
  %v1555 = vpop.f32.mrf.mxu0
  %v1556 = vadd.f32 %v1542, %v1555
  %v1557 = vpop.f32.mrf.mxu0
  %v1558 = vadd.f32 %v1544, %v1557
  %1559 = vdwg.mxu0
  %1560 = vmatpush.bf16.msra.mxu0 %v937
  %1561 = vmatpush.bf16.msra.mxu0 %v933
  %1562 = vmatpush.bf16.msra.mxu0 %v929
  %1563 = vmatpush.bf16.msra.mxu0 %v925
  %1564 = vmatpush.bf16.msra.mxu0 %v921
  %1565 = vmatpush.bf16.msra.mxu0 %v917
  %1566 = vmatpush.bf16.msra.mxu0 %v913
  %1567 = vmatpush.bf16.msra.mxu0 %v909
  %1568 = vmatmul.bf16.gmra.mxu0 %v43
  %v1569 = vpop.f32.mrf.mxu0
  %v1570 = vadd.f32 %v1556, %v1569
  %v1571 = vpop.f32.mrf.mxu0
  %v1572 = vadd.f32 %v1558, %v1571
  %1573 = vdwg.mxu0
  %1574 = vmatpush.bf16.msra.mxu0 %v969
  %1575 = vmatpush.bf16.msra.mxu0 %v965
  %1576 = vmatpush.bf16.msra.mxu0 %v961
  %1577 = vmatpush.bf16.msra.mxu0 %v957
  %1578 = vmatpush.bf16.msra.mxu0 %v953
  %1579 = vmatpush.bf16.msra.mxu0 %v949
  %1580 = vmatpush.bf16.msra.mxu0 %v945
  %1581 = vmatpush.bf16.msra.mxu0 %v941
  %1582 = vmatmul.bf16.gmra.mxu0 %v44
  %v1583 = vpop.f32.mrf.mxu0
  %v1584 = vadd.f32 %v1570, %v1583
  %v1585 = vpop.f32.mrf.mxu0
  %v1586 = vadd.f32 %v1572, %v1585
  %1587 = vdwg.mxu0
  %1588 = vmatpush.bf16.msra.mxu0 %v1001
  %1589 = vmatpush.bf16.msra.mxu0 %v997
  %1590 = vmatpush.bf16.msra.mxu0 %v993
  %1591 = vmatpush.bf16.msra.mxu0 %v989
  %1592 = vmatpush.bf16.msra.mxu0 %v985
  %1593 = vmatpush.bf16.msra.mxu0 %v981
  %1594 = vmatpush.bf16.msra.mxu0 %v977
  %1595 = vmatpush.bf16.msra.mxu0 %v973
  %1596 = vmatmul.bf16.gmra.mxu0 %v45
  %v1597 = vpop.f32.mrf.mxu0
  %v1598 = vadd.f32 %v1584, %v1597
  %v1599 = vpop.f32.mrf.mxu0
  %v1600 = vadd.f32 %v1586, %v1599
  %1601 = vdwg.mxu0
  %1602 = vmatpush.bf16.msra.mxu0 %v1033
  %1603 = vmatpush.bf16.msra.mxu0 %v1029
  %1604 = vmatpush.bf16.msra.mxu0 %v1025
  %1605 = vmatpush.bf16.msra.mxu0 %v1021
  %1606 = vmatpush.bf16.msra.mxu0 %v1017
  %1607 = vmatpush.bf16.msra.mxu0 %v1013
  %1608 = vmatpush.bf16.msra.mxu0 %v1009
  %1609 = vmatpush.bf16.msra.mxu0 %v1005
  %1610 = vmatmul.bf16.gmra.mxu0 %v46
  %v1611 = vpop.f32.mrf.mxu0
  %v1612 = vadd.f32 %v1598, %v1611
  %v1613 = vpop.f32.mrf.mxu0
  %v1614 = vadd.f32 %v1600, %v1613
  %1615 = vdwg.mxu0
  %1616 = vmatpush.bf16.msra.mxu0 0
  %1617 = vmatpush.bf16.msra.mxu0 0
  %1618 = vmatpush.bf16.msra.mxu0 0
  %1619 = vmatpush.bf16.msra.mxu0 0
  %1620 = vmatpush.bf16.msra.mxu0 0
  %1621 = vmatpush.bf16.msra.mxu0 0
  %1622 = vmatpush.bf16.msra.mxu0 0
  %1623 = vmatpush.bf16.msra.mxu0 %v1037
  %1624 = vmatmul.bf16.gmra.mxu0 %v1236
  %v1625 = vpop.f32.mrf.mxu0
  %v1626 = vadd.f32 %v1612, %v1625
  %v1627 = vpop.f32.mrf.mxu0
  %v1628 = vadd.f32 %v1614, %v1627
  %1629 = vdwg.mxu0
  %v1630 = vmax.f32 %v1332, 0.0
  %v1631 = vmax.f32 %v1430, 0.0
  %v1632 = vmax.f32 %v1528, 0.0
  %v1633 = vmax.f32 %v1626, 0.0
  %v1634 = vmax.f32 %v1334, 0.0
  %v1635 = vmax.f32 %v1432, 0.0
  %v1636 = vmax.f32 %v1530, 0.0
  %v1637 = vmax.f32 %v1628, 0.0
  %v1638 = vpack.c.bf16 %v1634, %v1630
  %v1639 = vpack.c.bf16 %v1635, %v1631
  %v1640 = vpack.c.bf16 %v1636, %v1632
  %v1641 = vpack.c.bf16 %v1637, %v1633
  %v1642 = vld [vmem:[%s3] sm:$0xff]
  %v1643 = vld [vmem:[%s3 + $0x8] sm:$0xff]
  %v1644 = vld [vmem:[%s3 + $0x10] sm:$0xff]
  %v1645 = vld [vmem:[%s3 + $0x18] sm:$0xff]
  %v1646 = vld [vmem:[%s3 + $0x20] sm:$0xff]
  %v1647 = vld [vmem:[%s3 + $0x28] sm:$0xff]
  %v1648 = vld [vmem:[%s3 + $0x30] sm:$0xff]
  %v1649 = vld [vmem:[%s3 + $0x38] sm:$0xff]
  %v1650 = vld [vmem:[%s3 + $0x40] sm:$0xff]
  %v1651 = vld [vmem:[%s3 + $0x48] sm:$0xff]
  %v1652 = vld [vmem:[%s3 + $0x50] sm:$0xff]
  %v1653 = vld [vmem:[%s3 + $0x58] sm:$0xff]
  %v1654 = vld [vmem:[%s3 + $0x60] sm:$0xff]
  %v1655 = vld [vmem:[%s3 + $0x68] sm:$0xff]
  %v1656 = vld [vmem:[%s3 + $0x70] sm:$0xff]
  %v1657 = vld [vmem:[%s3 + $0x78] sm:$0xff]
  %v1658 = vld [vmem:[%s3 + $0x80] sm:$0xff]
  %v1659 = vld [vmem:[%s3 + $0x88] sm:$0xff]
  %v1660 = vld [vmem:[%s3 + $0x90] sm:$0xff]
  %v1661 = vld [vmem:[%s3 + $0x98] sm:$0xff]
  %v1662 = vld [vmem:[%s3 + $0xa0] sm:$0xff]
  %v1663 = vld [vmem:[%s3 + $0xa8] sm:$0xff]
  %v1664 = vld [vmem:[%s3 + $0xb0] sm:$0xff]
  %v1665 = vld [vmem:[%s3 + $0xb8] sm:$0xff]
  %v1666 = vld [vmem:[%s3 + $0xc0] sm:$0xff]
  %v1667 = vld [vmem:[%s3 + $0xc8] sm:$0xff]
  %v1668 = vld [vmem:[%s3 + $0xd0] sm:$0xff]
  %v1669 = vld [vmem:[%s3 + $0xd8] sm:$0xff]
  %v1670 = vld [vmem:[%s3 + $0xe0] sm:$0xff]
  %v1671 = vld [vmem:[%s3 + $0xe8] sm:$0xff]
  %v1672 = vld [vmem:[%s3 + $0xf0] sm:$0xff]
  %v1673 = vld [vmem:[%s3 + $0xf8] sm:$0xff]
  %v1674 = vld [vmem:[%s3 + $0x100] sm:$0xff]
  %v1675 = vld [vmem:[%s3 + $0x108] sm:$0xff]
  %v1676 = vld [vmem:[%s3 + $0x110] sm:$0xff]
  %v1677 = vld [vmem:[%s3 + $0x118] sm:$0xff]
  %v1678 = vld [vmem:[%s3 + $0x120] sm:$0xff]
  %v1679 = vld [vmem:[%s3 + $0x128] sm:$0xff]
  %v1680 = vld [vmem:[%s3 + $0x130] sm:$0xff]
  %v1681 = vld [vmem:[%s3 + $0x138] sm:$0xff]
  %v1682 = vld [vmem:[%s3 + $0x140] sm:$0xff]
  %v1683 = vld [vmem:[%s3 + $0x148] sm:$0xff]
  %v1684 = vld [vmem:[%s3 + $0x150] sm:$0xff]
  %v1685 = vld [vmem:[%s3 + $0x158] sm:$0xff]
  %v1686 = vld [vmem:[%s3 + $0x160] sm:$0xff]
  %v1687 = vld [vmem:[%s3 + $0x168] sm:$0xff]
  %v1688 = vld [vmem:[%s3 + $0x170] sm:$0xff]
  %v1689 = vld [vmem:[%s3 + $0x178] sm:$0xff]
  %v1690 = vld [vmem:[%s3 + $0x180] sm:$0xff]
  %v1691 = vld [vmem:[%s3 + $0x188] sm:$0xff]
  %v1692 = vld [vmem:[%s3 + $0x190] sm:$0xff]
  %v1693 = vld [vmem:[%s3 + $0x198] sm:$0xff]
  %v1694 = vld [vmem:[%s3 + $0x1a0] sm:$0xff]
  %v1695 = vld [vmem:[%s3 + $0x1a8] sm:$0xff]
  %v1696 = vld [vmem:[%s3 + $0x1b0] sm:$0xff]
  %v1697 = vld [vmem:[%s3 + $0x1b8] sm:$0xff]
  %v1698 = vld [vmem:[%s3 + $0x1c0] sm:$0xff]
  %v1699 = vld [vmem:[%s3 + $0x1c8] sm:$0xff]
  %v1700 = vld [vmem:[%s3 + $0x1d0] sm:$0xff]
  %v1701 = vld [vmem:[%s3 + $0x1d8] sm:$0xff]
  %v1702 = vld [vmem:[%s3 + $0x1e0] sm:$0xff]
  %v1703 = vld [vmem:[%s3 + $0x1e8] sm:$0xff]
  %v1704 = vld [vmem:[%s3 + $0x1f0] sm:$0xff]
  %v1705 = vld [vmem:[%s3 + $0x1f8] sm:$0xff]
  %v1706 = vld [vmem:[%s4] sm:$0x3]
  %v1708 = vperm.slane %v1706, 0
  %v1709 = vperm.slane %v1706, 1
  %v1776 = vunpack.c.l.b16 %v1642
  %v1777 = vunpack.c.h.b16 %v1642
  %v1778 = vunpack.c.l.b16 %v1643
  %v1779 = vunpack.c.h.b16 %v1643
  %v1780 = vunpack.c.l.b16 %v1644
  %v1781 = vunpack.c.h.b16 %v1644
  %v1782 = vunpack.c.l.b16 %v1645
  %v1783 = vunpack.c.h.b16 %v1645
  %v1784 = vunpack.c.l.b16 %v1646
  %v1785 = vunpack.c.h.b16 %v1646
  %v1786 = vunpack.c.l.b16 %v1647
  %v1787 = vunpack.c.h.b16 %v1647
  %v1788 = vunpack.c.l.b16 %v1648
  %v1789 = vunpack.c.h.b16 %v1648
  %v1790 = vunpack.c.l.b16 %v1649
  %v1791 = vunpack.c.h.b16 %v1649
  %v1792 = vunpack.c.l.b16 %v1650
  %v1793 = vunpack.c.h.b16 %v1650
  %v1794 = vunpack.c.l.b16 %v1651
  %v1795 = vunpack.c.h.b16 %v1651
  %v1796 = vunpack.c.l.b16 %v1652
  %v1797 = vunpack.c.h.b16 %v1652
  %v1798 = vunpack.c.l.b16 %v1653
  %v1799 = vunpack.c.h.b16 %v1653
  %v1800 = vunpack.c.l.b16 %v1654
  %v1801 = vunpack.c.h.b16 %v1654
  %v1802 = vunpack.c.l.b16 %v1655
  %v1803 = vunpack.c.h.b16 %v1655
  %v1804 = vunpack.c.l.b16 %v1656
  %v1805 = vunpack.c.h.b16 %v1656
  %v1806 = vunpack.c.l.b16 %v1657
  %v1807 = vunpack.c.h.b16 %v1657
  %v1808 = vunpack.c.l.b16 %v1658
  %v1809 = vunpack.c.h.b16 %v1658
  %v1810 = vunpack.c.l.b16 %v1659
  %v1811 = vunpack.c.h.b16 %v1659
  %v1812 = vunpack.c.l.b16 %v1660
  %v1813 = vunpack.c.h.b16 %v1660
  %v1814 = vunpack.c.l.b16 %v1661
  %v1815 = vunpack.c.h.b16 %v1661
  %v1816 = vunpack.c.l.b16 %v1662
  %v1817 = vunpack.c.h.b16 %v1662
  %v1818 = vunpack.c.l.b16 %v1663
  %v1819 = vunpack.c.h.b16 %v1663
  %v1820 = vunpack.c.l.b16 %v1664
  %v1821 = vunpack.c.h.b16 %v1664
  %v1822 = vunpack.c.l.b16 %v1665
  %v1823 = vunpack.c.h.b16 %v1665
  %v1824 = vunpack.c.l.b16 %v1666
  %v1825 = vunpack.c.h.b16 %v1666
  %v1826 = vunpack.c.l.b16 %v1667
  %v1827 = vunpack.c.h.b16 %v1667
  %v1828 = vunpack.c.l.b16 %v1668
  %v1829 = vunpack.c.h.b16 %v1668
  %v1830 = vunpack.c.l.b16 %v1669
  %v1831 = vunpack.c.h.b16 %v1669
  %v1832 = vunpack.c.l.b16 %v1670
  %v1833 = vunpack.c.h.b16 %v1670
  %v1834 = vunpack.c.l.b16 %v1671
  %v1835 = vunpack.c.h.b16 %v1671
  %v1836 = vunpack.c.l.b16 %v1672
  %v1837 = vunpack.c.h.b16 %v1672
  %v1838 = vunpack.c.l.b16 %v1673
  %v1839 = vunpack.c.h.b16 %v1673
  %v1840 = vunpack.c.l.b16 %v1674
  %v1841 = vunpack.c.h.b16 %v1674
  %v1842 = vunpack.c.l.b16 %v1675
  %v1843 = vunpack.c.h.b16 %v1675
  %v1844 = vunpack.c.l.b16 %v1676
  %v1845 = vunpack.c.h.b16 %v1676
  %v1846 = vunpack.c.l.b16 %v1677
  %v1847 = vunpack.c.h.b16 %v1677
  %v1848 = vunpack.c.l.b16 %v1678
  %v1849 = vunpack.c.h.b16 %v1678
  %v1850 = vunpack.c.l.b16 %v1679
  %v1851 = vunpack.c.h.b16 %v1679
  %v1852 = vunpack.c.l.b16 %v1680
  %v1853 = vunpack.c.h.b16 %v1680
  %v1854 = vunpack.c.l.b16 %v1681
  %v1855 = vunpack.c.h.b16 %v1681
  %v1856 = vunpack.c.l.b16 %v1682
  %v1857 = vunpack.c.h.b16 %v1682
  %v1858 = vunpack.c.l.b16 %v1683
  %v1859 = vunpack.c.h.b16 %v1683
  %v1860 = vunpack.c.l.b16 %v1684
  %v1861 = vunpack.c.h.b16 %v1684
  %v1862 = vunpack.c.l.b16 %v1685
  %v1863 = vunpack.c.h.b16 %v1685
  %v1864 = vunpack.c.l.b16 %v1686
  %v1865 = vunpack.c.h.b16 %v1686
  %v1866 = vunpack.c.l.b16 %v1687
  %v1867 = vunpack.c.h.b16 %v1687
  %v1868 = vunpack.c.l.b16 %v1688
  %v1869 = vunpack.c.h.b16 %v1688
  %v1870 = vunpack.c.l.b16 %v1689
  %v1871 = vunpack.c.h.b16 %v1689
  %v1872 = vunpack.c.l.b16 %v1690
  %v1873 = vunpack.c.h.b16 %v1690
  %v1874 = vunpack.c.l.b16 %v1691
  %v1875 = vunpack.c.h.b16 %v1691
  %v1876 = vunpack.c.l.b16 %v1692
  %v1877 = vunpack.c.h.b16 %v1692
  %v1878 = vunpack.c.l.b16 %v1693
  %v1879 = vunpack.c.h.b16 %v1693
  %v1880 = vunpack.c.l.b16 %v1694
  %v1881 = vunpack.c.h.b16 %v1694
  %v1882 = vunpack.c.l.b16 %v1695
  %v1883 = vunpack.c.h.b16 %v1695
  %v1884 = vunpack.c.l.b16 %v1696
  %v1885 = vunpack.c.h.b16 %v1696
  %v1886 = vunpack.c.l.b16 %v1697
  %v1887 = vunpack.c.h.b16 %v1697
  %v1888 = vunpack.c.l.b16 %v1698
  %v1889 = vunpack.c.h.b16 %v1698
  %v1890 = vunpack.c.l.b16 %v1699
  %v1891 = vunpack.c.h.b16 %v1699
  %v1892 = vunpack.c.l.b16 %v1700
  %v1893 = vunpack.c.h.b16 %v1700
  %v1894 = vunpack.c.l.b16 %v1701
  %v1895 = vunpack.c.h.b16 %v1701
  %v1896 = vunpack.c.l.b16 %v1702
  %v1897 = vunpack.c.h.b16 %v1702
  %v1898 = vunpack.c.l.b16 %v1703
  %v1899 = vunpack.c.h.b16 %v1703
  %v1900 = vunpack.c.l.b16 %v1704
  %v1901 = vunpack.c.h.b16 %v1704
  %v1902 = vunpack.c.l.b16 %v1705
  %v1903 = vunpack.c.h.b16 %v1705
  %v1904 = vpack.c.b16 %v1778, %v1776
  %v1905 = vpack.c.b16 %v1779, %v1777
  %v1906 = vpack.c.b16 %v1782, %v1780
  %v1907 = vpack.c.b16 %v1783, %v1781
  %v1908 = vpack.c.b16 %v1786, %v1784
  %v1909 = vpack.c.b16 %v1787, %v1785
  %v1910 = vpack.c.b16 %v1790, %v1788
  %v1911 = vpack.c.b16 %v1791, %v1789
  %v1912 = vpack.c.b16 %v1794, %v1792
  %v1913 = vpack.c.b16 %v1795, %v1793
  %v1914 = vpack.c.b16 %v1798, %v1796
  %v1915 = vpack.c.b16 %v1799, %v1797
  %v1916 = vpack.c.b16 %v1802, %v1800
  %v1917 = vpack.c.b16 %v1803, %v1801
  %v1918 = vpack.c.b16 %v1806, %v1804
  %v1919 = vpack.c.b16 %v1807, %v1805
  %v1920 = vpack.c.b16 %v1810, %v1808
  %v1921 = vpack.c.b16 %v1811, %v1809
  %v1922 = vpack.c.b16 %v1814, %v1812
  %v1923 = vpack.c.b16 %v1815, %v1813
  %v1924 = vpack.c.b16 %v1818, %v1816
  %v1925 = vpack.c.b16 %v1819, %v1817
  %v1926 = vpack.c.b16 %v1822, %v1820
  %v1927 = vpack.c.b16 %v1823, %v1821
  %v1928 = vpack.c.b16 %v1826, %v1824
  %v1929 = vpack.c.b16 %v1827, %v1825
  %v1930 = vpack.c.b16 %v1830, %v1828
  %v1931 = vpack.c.b16 %v1831, %v1829
  %v1932 = vpack.c.b16 %v1834, %v1832
  %v1933 = vpack.c.b16 %v1835, %v1833
  %v1934 = vpack.c.b16 %v1838, %v1836
  %v1935 = vpack.c.b16 %v1839, %v1837
  %v1936 = vpack.c.b16 %v1842, %v1840
  %v1937 = vpack.c.b16 %v1843, %v1841
  %v1938 = vpack.c.b16 %v1846, %v1844
  %v1939 = vpack.c.b16 %v1847, %v1845
  %v1940 = vpack.c.b16 %v1850, %v1848
  %v1941 = vpack.c.b16 %v1851, %v1849
  %v1942 = vpack.c.b16 %v1854, %v1852
  %v1943 = vpack.c.b16 %v1855, %v1853
  %v1944 = vpack.c.b16 %v1858, %v1856
  %v1945 = vpack.c.b16 %v1859, %v1857
  %v1946 = vpack.c.b16 %v1862, %v1860
  %v1947 = vpack.c.b16 %v1863, %v1861
  %v1948 = vpack.c.b16 %v1866, %v1864
  %v1949 = vpack.c.b16 %v1867, %v1865
  %v1950 = vpack.c.b16 %v1870, %v1868
  %v1951 = vpack.c.b16 %v1871, %v1869
  %v1952 = vpack.c.b16 %v1874, %v1872
  %v1953 = vpack.c.b16 %v1875, %v1873
  %v1954 = vpack.c.b16 %v1878, %v1876
  %v1955 = vpack.c.b16 %v1879, %v1877
  %v1956 = vpack.c.b16 %v1882, %v1880
  %v1957 = vpack.c.b16 %v1883, %v1881
  %v1958 = vpack.c.b16 %v1886, %v1884
  %v1959 = vpack.c.b16 %v1887, %v1885
  %v1960 = vpack.c.b16 %v1890, %v1888
  %v1961 = vpack.c.b16 %v1891, %v1889
  %v1962 = vpack.c.b16 %v1894, %v1892
  %v1963 = vpack.c.b16 %v1895, %v1893
  %v1964 = vpack.c.b16 %v1898, %v1896
  %v1965 = vpack.c.b16 %v1899, %v1897
  %v1966 = vpack.c.b16 %v1902, %v1900
  %v1967 = vpack.c.b16 %v1903, %v1901
  %2032 = vmatpush.bf16.msra.mxu0 %v1918
  %2033 = vmatpush.bf16.msra.mxu0 %v1916
  %2034 = vmatpush.bf16.msra.mxu0 %v1914
  %2035 = vmatpush.bf16.msra.mxu0 %v1912
  %2036 = vmatpush.bf16.msra.mxu0 %v1910
  %2037 = vmatpush.bf16.msra.mxu0 %v1908
  %2038 = vmatpush.bf16.msra.mxu0 %v1906
  %2039 = vmatpush.bf16.msra.mxu0 %v1904
  %2040 = vmatmul.bf16.gmra.mxu0 %v1638
  %v2041 = vpop.f32.mrf.mxu0
  %v2042 = vadd.f32 %v1708, %v2041
  %v2043 = vpop.f32.mrf.mxu0
  %v2044 = vadd.f32 %v1708, %v2043
  %2045 = vdwg.mxu0
  %2046 = vmatpush.bf16.msra.mxu0 %v1934
  %2047 = vmatpush.bf16.msra.mxu0 %v1932
  %2048 = vmatpush.bf16.msra.mxu0 %v1930
  %2049 = vmatpush.bf16.msra.mxu0 %v1928
  %2050 = vmatpush.bf16.msra.mxu0 %v1926
  %2051 = vmatpush.bf16.msra.mxu0 %v1924
  %2052 = vmatpush.bf16.msra.mxu0 %v1922
  %2053 = vmatpush.bf16.msra.mxu0 %v1920
  %2054 = vmatmul.bf16.gmra.mxu0 %v1639
  %v2055 = vpop.f32.mrf.mxu0
  %v2056 = vadd.f32 %v2042, %v2055
  %v2057 = vpop.f32.mrf.mxu0
  %v2058 = vadd.f32 %v2044, %v2057
  %2059 = vdwg.mxu0
  %2060 = vmatpush.bf16.msra.mxu0 %v1950
  %2061 = vmatpush.bf16.msra.mxu0 %v1948
  %2062 = vmatpush.bf16.msra.mxu0 %v1946
  %2063 = vmatpush.bf16.msra.mxu0 %v1944
  %2064 = vmatpush.bf16.msra.mxu0 %v1942
  %2065 = vmatpush.bf16.msra.mxu0 %v1940
  %2066 = vmatpush.bf16.msra.mxu0 %v1938
  %2067 = vmatpush.bf16.msra.mxu0 %v1936
  %2068 = vmatmul.bf16.gmra.mxu0 %v1640
  %v2069 = vpop.f32.mrf.mxu0
  %v2070 = vadd.f32 %v2056, %v2069
  %v2071 = vpop.f32.mrf.mxu0
  %v2072 = vadd.f32 %v2058, %v2071
  %2073 = vdwg.mxu0
  %2074 = vmatpush.bf16.msra.mxu0 %v1966
  %2075 = vmatpush.bf16.msra.mxu0 %v1964
  %2076 = vmatpush.bf16.msra.mxu0 %v1962
  %2077 = vmatpush.bf16.msra.mxu0 %v1960
  %2078 = vmatpush.bf16.msra.mxu0 %v1958
  %2079 = vmatpush.bf16.msra.mxu0 %v1956
  %2080 = vmatpush.bf16.msra.mxu0 %v1954
  %2081 = vmatpush.bf16.msra.mxu0 %v1952
  %2082 = vmatmul.bf16.gmra.mxu0 %v1641
  %v2083 = vpop.f32.mrf.mxu0
  %v2084 = vadd.f32 %v2070, %v2083
  %v2085 = vpop.f32.mrf.mxu0
  %v2086 = vadd.f32 %v2072, %v2085
  %2087 = vdwg.mxu0
  %2088 = vmatpush.bf16.msra.mxu0 %v1919
  %2089 = vmatpush.bf16.msra.mxu0 %v1917
  %2090 = vmatpush.bf16.msra.mxu0 %v1915
  %2091 = vmatpush.bf16.msra.mxu0 %v1913
  %2092 = vmatpush.bf16.msra.mxu0 %v1911
  %2093 = vmatpush.bf16.msra.mxu0 %v1909
  %2094 = vmatpush.bf16.msra.mxu0 %v1907
  %2095 = vmatpush.bf16.msra.mxu0 %v1905
  %2096 = vmatmul.bf16.gmra.mxu0 %v1638
  %v2097 = vpop.f32.mrf.mxu0
  %v2098 = vadd.f32 %v1709, %v2097
  %v2099 = vpop.f32.mrf.mxu0
  %v2100 = vadd.f32 %v1709, %v2099
  %2101 = vdwg.mxu0
  %2102 = vmatpush.bf16.msra.mxu0 %v1935
  %2103 = vmatpush.bf16.msra.mxu0 %v1933
  %2104 = vmatpush.bf16.msra.mxu0 %v1931
  %2105 = vmatpush.bf16.msra.mxu0 %v1929
  %2106 = vmatpush.bf16.msra.mxu0 %v1927
  %2107 = vmatpush.bf16.msra.mxu0 %v1925
  %2108 = vmatpush.bf16.msra.mxu0 %v1923
  %2109 = vmatpush.bf16.msra.mxu0 %v1921
  %2110 = vmatmul.bf16.gmra.mxu0 %v1639
  %v2111 = vpop.f32.mrf.mxu0
  %v2112 = vadd.f32 %v2098, %v2111
  %v2113 = vpop.f32.mrf.mxu0
  %v2114 = vadd.f32 %v2100, %v2113
  %2115 = vdwg.mxu0
  %2116 = vmatpush.bf16.msra.mxu0 %v1951
  %2117 = vmatpush.bf16.msra.mxu0 %v1949
  %2118 = vmatpush.bf16.msra.mxu0 %v1947
  %2119 = vmatpush.bf16.msra.mxu0 %v1945
  %2120 = vmatpush.bf16.msra.mxu0 %v1943
  %2121 = vmatpush.bf16.msra.mxu0 %v1941
  %2122 = vmatpush.bf16.msra.mxu0 %v1939
  %2123 = vmatpush.bf16.msra.mxu0 %v1937
  %2124 = vmatmul.bf16.gmra.mxu0 %v1640
  %v2125 = vpop.f32.mrf.mxu0
  %v2126 = vadd.f32 %v2112, %v2125
  %v2127 = vpop.f32.mrf.mxu0
  %v2128 = vadd.f32 %v2114, %v2127
  %2129 = vdwg.mxu0
  %2130 = vmatpush.bf16.msra.mxu0 %v1967
  %2131 = vmatpush.bf16.msra.mxu0 %v1965
  %2132 = vmatpush.bf16.msra.mxu0 %v1963
  %2133 = vmatpush.bf16.msra.mxu0 %v1961
  %2134 = vmatpush.bf16.msra.mxu0 %v1959
  %2135 = vmatpush.bf16.msra.mxu0 %v1957
  %2136 = vmatpush.bf16.msra.mxu0 %v1955
  %2137 = vmatpush.bf16.msra.mxu0 %v1953
  %2138 = vmatmul.bf16.gmra.mxu0 %v1641
  %v2139 = vpop.f32.mrf.mxu0
  %v2140 = vadd.f32 %v2126, %v2139
  %v2141 = vpop.f32.mrf.mxu0
  %v2142 = vadd.f32 %v2128, %v2141
  %2143 = vdwg.mxu0
  %v2144 = vmax.f32 %v2084, 0.0
  %v2145 = vmax.f32 %v2140, 0.0
  %v2146 = vmax.f32 %v2086, 0.0
  %v2147 = vmax.f32 %v2142, 0.0
  %v2148 = vpack.c.bf16 %v2146, %v2144
  %v2149 = vpack.c.bf16 %v2147, %v2145
  %v2150 = vld [vmem:[%s5] sm:$0xf]
  %v2151 = vld [vmem:[%s5 + $0x4] sm:$0xf]
  %v2152 = vld [vmem:[%s5 + $0x8] sm:$0xf]
  %v2153 = vld [vmem:[%s5 + $0xc] sm:$0xf]
  %v2154 = vld [vmem:[%s5 + $0x10] sm:$0xf]
  %v2155 = vld [vmem:[%s5 + $0x14] sm:$0xf]
  %v2156 = vld [vmem:[%s5 + $0x18] sm:$0xf]
  %v2157 = vld [vmem:[%s5 + $0x1c] sm:$0xf]
  %v2158 = vld [vmem:[%s5 + $0x20] sm:$0xf]
  %v2159 = vld [vmem:[%s5 + $0x24] sm:$0xf]
  %v2160 = vld [vmem:[%s5 + $0x28] sm:$0xf]
  %v2161 = vld [vmem:[%s5 + $0x2c] sm:$0xf]
  %v2162 = vld [vmem:[%s5 + $0x30] sm:$0xf]
  %v2163 = vld [vmem:[%s5 + $0x34] sm:$0xf]
  %v2164 = vld [vmem:[%s5 + $0x38] sm:$0xf]
  %v2165 = vld [vmem:[%s5 + $0x3c] sm:$0xf]
  %v2166 = vld [vmem:[%s5 + $0x40] sm:$0xf]
  %v2167 = vld [vmem:[%s5 + $0x44] sm:$0xf]
  %v2168 = vld [vmem:[%s5 + $0x48] sm:$0xf]
  %v2169 = vld [vmem:[%s5 + $0x4c] sm:$0xf]
  %v2170 = vld [vmem:[%s5 + $0x50] sm:$0xf]
  %v2171 = vld [vmem:[%s5 + $0x54] sm:$0xf]
  %v2172 = vld [vmem:[%s5 + $0x58] sm:$0xf]
  %v2173 = vld [vmem:[%s5 + $0x5c] sm:$0xf]
  %v2174 = vld [vmem:[%s5 + $0x60] sm:$0xf]
  %v2175 = vld [vmem:[%s5 + $0x64] sm:$0xf]
  %v2176 = vld [vmem:[%s5 + $0x68] sm:$0xf]
  %v2177 = vld [vmem:[%s5 + $0x6c] sm:$0xf]
  %v2178 = vld [vmem:[%s5 + $0x70] sm:$0xf]
  %v2179 = vld [vmem:[%s5 + $0x74] sm:$0xf]
  %v2180 = vld [vmem:[%s5 + $0x78] sm:$0xf]
  %v2181 = vld [vmem:[%s5 + $0x7c] sm:$0xf]
  %v2182 = vld [vmem:[%s6] sm:$0x1]
  %v2184 = vperm.slane %v2182, 0
  %v2218 = vunpack.c.l.b16 %v2150
  %v2219 = vunpack.c.l.b16 %v2151
  %v2220 = vunpack.c.l.b16 %v2152
  %v2221 = vunpack.c.l.b16 %v2153
  %v2222 = vunpack.c.l.b16 %v2154
  %v2223 = vunpack.c.l.b16 %v2155
  %v2224 = vunpack.c.l.b16 %v2156
  %v2225 = vunpack.c.l.b16 %v2157
  %v2226 = vunpack.c.l.b16 %v2158
  %v2227 = vunpack.c.l.b16 %v2159
  %v2228 = vunpack.c.l.b16 %v2160
  %v2229 = vunpack.c.l.b16 %v2161
  %v2230 = vunpack.c.l.b16 %v2162
  %v2231 = vunpack.c.l.b16 %v2163
  %v2232 = vunpack.c.l.b16 %v2164
  %v2233 = vunpack.c.l.b16 %v2165
  %v2234 = vunpack.c.l.b16 %v2166
  %v2235 = vunpack.c.l.b16 %v2167
  %v2236 = vunpack.c.l.b16 %v2168
  %v2237 = vunpack.c.l.b16 %v2169
  %v2238 = vunpack.c.l.b16 %v2170
  %v2239 = vunpack.c.l.b16 %v2171
  %v2240 = vunpack.c.l.b16 %v2172
  %v2241 = vunpack.c.l.b16 %v2173
  %v2242 = vunpack.c.l.b16 %v2174
  %v2243 = vunpack.c.l.b16 %v2175
  %v2244 = vunpack.c.l.b16 %v2176
  %v2245 = vunpack.c.l.b16 %v2177
  %v2246 = vunpack.c.l.b16 %v2178
  %v2247 = vunpack.c.l.b16 %v2179
  %v2248 = vunpack.c.l.b16 %v2180
  %v2249 = vunpack.c.l.b16 %v2181
  %v2250 = vpack.c.b16 %v2219, %v2218
  %v2251 = vpack.c.b16 %v2221, %v2220
  %v2252 = vpack.c.b16 %v2223, %v2222
  %v2253 = vpack.c.b16 %v2225, %v2224
  %v2254 = vpack.c.b16 %v2227, %v2226
  %v2255 = vpack.c.b16 %v2229, %v2228
  %v2256 = vpack.c.b16 %v2231, %v2230
  %v2257 = vpack.c.b16 %v2233, %v2232
  %v2258 = vpack.c.b16 %v2235, %v2234
  %v2259 = vpack.c.b16 %v2237, %v2236
  %v2260 = vpack.c.b16 %v2239, %v2238
  %v2261 = vpack.c.b16 %v2241, %v2240
  %v2262 = vpack.c.b16 %v2243, %v2242
  %v2263 = vpack.c.b16 %v2245, %v2244
  %v2264 = vpack.c.b16 %v2247, %v2246
  %v2265 = vpack.c.b16 %v2249, %v2248
  %2282 = vmatpush.bf16.msra.mxu0 %v2257
  %2283 = vmatpush.bf16.msra.mxu0 %v2256
  %2284 = vmatpush.bf16.msra.mxu0 %v2255
  %2285 = vmatpush.bf16.msra.mxu0 %v2254
  %2286 = vmatpush.bf16.msra.mxu0 %v2253
  %2287 = vmatpush.bf16.msra.mxu0 %v2252
  %2288 = vmatpush.bf16.msra.mxu0 %v2251
  %2289 = vmatpush.bf16.msra.mxu0 %v2250
  %2290 = vmatmul.bf16.gmra.mxu0 %v2148
  %v2291 = vpop.f32.mrf.mxu0
  %v2292 = vadd.f32 %v2184, %v2291
  %v2293 = vpop.f32.mrf.mxu0
  %v2294 = vadd.f32 %v2184, %v2293
  %2295 = vdwg.mxu0
  %2296 = vmatpush.bf16.msra.mxu0 %v2265
  %2297 = vmatpush.bf16.msra.mxu0 %v2264
  %2298 = vmatpush.bf16.msra.mxu0 %v2263
  %2299 = vmatpush.bf16.msra.mxu0 %v2262
  %2300 = vmatpush.bf16.msra.mxu0 %v2261
  %2301 = vmatpush.bf16.msra.mxu0 %v2260
  %2302 = vmatpush.bf16.msra.mxu0 %v2259
  %2303 = vmatpush.bf16.msra.mxu0 %v2258
  %2304 = vmatmul.bf16.gmra.mxu0 %v2149
  %v2305 = vpop.f32.mrf.mxu0
  %v2306 = vadd.f32 %v2292, %v2305
  %v2307 = vpop.f32.mrf.mxu0
  %v2308 = vadd.f32 %v2294, %v2307
  %2309 = vdwg.mxu0
  %v2310 = vpack.c.bf16 %v2306, %v2306
  %v2311 = vpack.c.bf16 %v2308, %v2308
  %2312 = vst [vmem:[%s7] sm:$0xf] %v2310
  %2313 = vst [vmem:[%s7 + $0x4] sm:$0xf] %v2311
  // Predicated region
  $region30: #{mlp_forward.1} parent=0 // pred_check
    _
  $region31: #{mlp_forward.1} parent=0 // pred_check_branch
    %2315 = sbr.rel (0) target = $region33
  $region32: #{mlp_forward.1} parent=0 // pred_region
    _
  $region33: #{mlp_forward.1} parent=0 // pred_fallthru
    _
  // Predicated region
  $region34: #{mlp_forward.1} parent=0 // pred_check
    _
  $region35: #{mlp_forward.1} parent=0 // pred_check_branch
    %2317 = sbr.rel (0) target = $region37
  $region36: #{mlp_forward.1} parent=0 // pred_region
    _
  $region37: #{mlp_forward.1} parent=0 // pred_fallthru
    _

</llo_original>
